<compile_context>
chip_gen: v5e
topology: v5e:2x2
jax: 0.10.0
libtpu: 0.0.40
codegen_flags: <defaults>
</compile_context>

<pallas_src>
import functools
import math

import jax
import jax.numpy as jnp
from jax.experimental import pallas as pl
from jax.experimental.pallas import tpu as pltpu


# ---------------------------------------------------------------------------
# small helpers
# ---------------------------------------------------------------------------
def _round_up(x, m):
    return ((x + m - 1) // m) * m


def _physical_vmem_bytes():
    """Best-effort per-core VMEM query; conservative 64 MiB fallback (v7x-safe)."""
    default = 64 * 1024 * 1024
    get_info = getattr(pltpu, "get_tpu_info", None)
    if get_info is None:
        return default
    try:
        info = get_info()
    except Exception:
        return default
    for name in ("vmem_capacity_bytes", "vmem_size_bytes", "vmem_bytes"):
        v = getattr(info, name, None)
        if v:
            try:
                return int(v)
            except Exception:
                continue
    return default


def _vmem_budget_bytes():
    phys = _physical_vmem_bytes()
    if phys <= 64 * 1024 * 1024:
        # v7x: 64 MiB physical per TensorCore -> leave headroom for Mosaic scratch/semaphores.
        return 52 * 1024 * 1024
    # v5e / v6e: 128 MiB physical -> spend the headroom on larger tiles.
    return min(100 * 1024 * 1024, int(0.8 * phys))


def _mosaic_params(dimension_semantics, vmem_estimate_bytes, budget):
    limit = int(min(max(vmem_estimate_bytes, 32 * 1024 * 1024), budget))
    return pltpu.CompilerParams(dimension_semantics=dimension_semantics,
                                vmem_limit_bytes=limit)


def _pick_seg_block(nseg, S, H, bias_itemsize, budget, target_rows=512):
    """Segments per grid step: target >=target_rows rows per block, VMEM-aware for the bias tile."""
    if S % 8 != 0:
        return 1
    target = max(1, target_rows // max(S, 1))
    bias_per_seg = max(1, 2 * H * S * S * bias_itemsize)        # double-buffered bias tile
    target = max(1, min(target, int(0.30 * budget) // bias_per_seg))
    for g in range(min(nseg, target), 0, -1):
        if nseg % g == 0:
            return g
    return 1


def _pick_ff_tile(F, D, w_bytes, budget):
    """d_ff tile: keep double-buffered wi+wo tiles within ~45% of the VMEM budget."""
    weight_budget = int(0.45 * budget)
    divisors = [c for c in (4096, 2048, 1024, 512, 256, 128) if F % c == 0]
    for c in divisors:
        if 4 * D * c * w_bytes <= weight_budget:
            return c
    if divisors:
        return divisors[-1]
    return F


# ---------------------------------------------------------------------------
# relative position bias (plain JAX — per-element gather has no clean Pallas equivalent)
# ---------------------------------------------------------------------------
def _relative_position_bucket(relative_position, num_buckets_cfg, max_distance):
    num_buckets = num_buckets_cfg // 2
    rel_buckets = (relative_position > 0).astype(jnp.int32) * num_buckets
    rp = jnp.abs(relative_position)
    max_exact = num_buckets // 2
    is_small = rp < max_exact
    rp_f = jnp.maximum(rp.astype(jnp.float32), 1.0)      # safe log; masked by where
    rp_large = max_exact + (jnp.log(rp_f / max_exact) / math.log(max_distance / max_exact)
                            * (num_buckets - max_exact)).astype(jnp.int32)
    rp_large = jnp.minimum(rp_large, num_buckets - 1)
    return rel_buckets + jnp.where(is_small, rp, rp_large)


def _position_bias(q_pos, k_pos, rel_bias_weight, num_buckets, max_distance, dtype):
    # TODO(synk): the bucket -> embedding-table gather stays in plain JAX; a per-element
    # gather has no clean Pallas/Mosaic equivalent, so a dense bias is fed to the kernel.
    # (If positions are known to be identical per segment, this could be deduplicated to a
    # single (1,H,S,S) block — not assumed here since positions are runtime inputs.)
    rel = k_pos[:, None, :].astype(jnp.int32) - q_pos[:, :, None].astype(jnp.int32)   # (B,S,S)
    buckets = _relative_position_bucket(rel, num_buckets, max_distance)               # (B,S,S)
    values = jnp.take(rel_bias_weight, buckets, axis=0)                               # (B,S,S,H)
    return jnp.transpose(values, (0, 3, 1, 2)).astype(dtype)                          # (B,H,S,S)


# ---------------------------------------------------------------------------
# kernel 1: T5LayerSelfAttention (+ residual)
# ---------------------------------------------------------------------------
def _t5_attn_kernel(x_ref, bias_ref, mask_ref, gamma_ref, wq_ref, wk_ref, wv_ref, wo_ref,
                    o_ref, *, eps, num_heads):
    G, S, D = x_ref.shape
    inner = wq_ref.shape[1]
    H = num_heads
    dk = inner // H
    cdt = wq_ref.dtype                                  # compute dtype (bf16 weights -> bf16 MXU)

    # --- T5LayerNorm (RMSNorm, f32 variance) ---
    xf = x_ref[...].astype(jnp.float32)
    var = jnp.mean(xf * xf, axis=-1, keepdims=True)
    xn = gamma_ref[...].astype(jnp.float32) * (xf * jax.lax.rsqrt(var + eps))
    xn2 = xn.reshape(G * S, D).astype(cdt)

    # --- q/k/v projections (MXU matmuls, f32 accumulation, compute-dtype outputs) ---
    q = jnp.dot(xn2, wq_ref[...], preferred_element_type=jnp.float32).astype(cdt)   # (G*S, inner)
    k = jnp.dot(xn2, wk_ref[...], preferred_element_type=jnp.float32).astype(cdt)
    v = jnp.dot(xn2, wv_ref[...], preferred_element_type=jnp.float32).astype(cdt)

    # Mask penalty stays in f32 inside the kernel (avoids bf16 rounding of the -1000 offset).
    penalty = -1000.0 * (1.0 - mask_ref[...].astype(jnp.float32))                    # (G, 1, S)

    # Per-head scores / softmax / context.
    # TODO(synk): batching all heads into one einsum needs a multi-batch-dim dot_general
    # which the Mosaic lowering does not cleanly support; heads stay as a static unroll
    # with compute-dtype matmul inputs (bf16-rate MXU) + f32 accumulation.
    ctx_heads = []
    for h in range(H):
        qh = q[:, h * dk:(h + 1) * dk].reshape(G, S, dk)
        kh = k[:, h * dk:(h + 1) * dk].reshape(G, S, dk)
        vh = v[:, h * dk:(h + 1) * dk].reshape(G, S, dk)
        s = jnp.einsum('gqd,gkd->gqk', qh, kh, preferred_element_type=jnp.float32)   # (G,S,S)
        s = s + bias_ref[:, h, :, :].astype(jnp.float32) + penalty
        m = jnp.max(s, axis=-1, keepdims=True)
        e = jnp.exp(s - m)
        p = e * pl.reciprocal(jnp.sum(e, axis=-1, keepdims=True), approx=True)        # softmax
        c = jnp.einsum('gqk,gkd->gqd', p.astype(cdt), vh,
                       preferred_element_type=jnp.float32)
        ctx_heads.append(c.reshape(G * S, dk).astype(cdt))

    ctx = jnp.concatenate(ctx_heads, axis=-1)                                         # (G*S, inner)
    attn = jnp.dot(ctx, wo_ref[...], preferred_element_type=jnp.float32)              # (G*S, D)

    # dropout = identity at inference; residual add from T5Block (re-read x, no long f32 live).
    o_ref[...] = (attn.reshape(G, S, D) + x_ref[...].astype(jnp.float32)).astype(o_ref.dtype)


def _t5_self_attention(x_seg, bias, mask_seg, gamma, wq, wk, wv, wo, *,
                       eps, num_heads, budget):
    nseg, S, D = x_seg.shape
    H = num_heads
    inner = wq.shape[1]
    b_bytes = jnp.dtype(bias.dtype).itemsize
    G = _pick_seg_block(nseg, S, H, b_bytes, budget)
    grid = (nseg // G,)
    gamma2d = gamma.reshape(1, D)
    mask3d = mask_seg.reshape(nseg, 1, S).astype(jnp.float32)

    w_bytes = jnp.dtype(wq.dtype).itemsize
    x_bytes = jnp.dtype(x_seg.dtype).itemsize
    vmem_est = int(1.25 * (
        (3 * D * inner + inner * D) * w_bytes        # weights (constant index maps, fetched once)
        + 2 * 2 * G * S * D * x_bytes                # x + out tiles (double-buffered)
        + 2 * G * H * S * S * b_bytes                # bias tiles (double-buffered)
        + 2 * G * S * 4                              # mask tiles
        + G * S * (4 * inner + D) * 4                # q/k/v/ctx + attn f32/cdt intermediates
        + 4 * G * S * S * 4))                        # per-head scores / probs live in f32

    return pl.pallas_call(
        functools.partial(_t5_attn_kernel, eps=eps, num_heads=num_heads),
        out_shape=jax.ShapeDtypeStruct((nseg, S, D), x_seg.dtype),
        grid_spec=pltpu.PrefetchScalarGridSpec(
            num_scalar_prefetch=0,
            grid=grid,
            in_specs=[
                pl.BlockSpec((G, S, D), lambda i: (i, 0, 0)),        # x (segment block)
                pl.BlockSpec((G, H, S, S), lambda i: (i, 0, 0, 0)),  # rel-pos bias (act dtype)
                pl.BlockSpec((G, 1, S), lambda i: (i, 0, 0)),        # key mask (f32)
                pl.BlockSpec((1, D), lambda i: (0, 0)),              # layer-norm gamma
                pl.BlockSpec((D, inner), lambda i: (0, 0)),          # wq
                pl.BlockSpec((D, inner), lambda i: (0, 0)),          # wk
                pl.BlockSpec((D, inner), lambda i: (0, 0)),          # wv
                pl.BlockSpec((inner, D), lambda i: (0, 0)),          # wo
            ],
            out_specs=pl.BlockSpec((G, S, D), lambda i: (i, 0, 0)),
        ),
        compiler_params=_mosaic_params(("parallel",), vmem_est, budget),
    )(x_seg, bias, mask3d, gamma2d, wq, wk, wv, wo)


# ---------------------------------------------------------------------------
# kernel 2: T5LayerFF (+ residual), d_ff tiled with f32 accumulator
# ---------------------------------------------------------------------------
def _t5_ff_kernel(x_ref, gamma_ref, wi_ref, wo_ref, o_ref, xn_ref, acc_ref, *, eps):
    k = pl.program_id(1)

    @pl.when(k == 0)
    def _():
        x = x_ref[...].astype(jnp.float32)
        var = jnp.mean(x * x, axis=-1, keepdims=True)
        xn = gamma_ref[...].astype(jnp.float32) * (x * jax.lax.rsqrt(var + eps))
        xn_ref[...] = xn.astype(xn_ref.dtype)            # compute dtype (bf16 if weights bf16)
        acc_ref[...] = jnp.zeros_like(acc_ref)

    # wi tile -> relu -> wo tile, accumulated in f32 (ReLU is elementwise, so tiling d_ff
    # decomposes exactly).
    h = jnp.dot(xn_ref[...], wi_ref[...], preferred_element_type=jnp.float32)
    h = jnp.maximum(h, 0.0).astype(wo_ref.dtype)
    acc_ref[...] += jnp.dot(h, wo_ref[...], preferred_element_type=jnp.float32)

    @pl.when(k == pl.num_programs(1) - 1)
    def _():
        # dropout = identity at inference; residual add from T5Block.
        o_ref[...] = (acc_ref[...] + x_ref[...].astype(jnp.float32)).astype(o_ref.dtype)


def _t5_ff(x2d, gamma, wi, wo, *, eps, budget, block_rows=512):
    R, D = x2d.shape
    F = wi.shape[1]
    w_bytes = jnp.dtype(wi.dtype).itemsize
    x_bytes = jnp.dtype(x2d.dtype).itemsize
    compute_dtype = wi.dtype

    tf = _pick_ff_tile(F, D, w_bytes, budget)            # d_ff tile (VMEM-aware)
    tm = min(block_rows, _round_up(R, 8))                # large M tile, sublane aligned

    def _est(tm_):
        return int(1.15 * (4 * D * tf * w_bytes          # wi + wo tiles (double-buffered)
                           + 4 * tm_ * D * x_bytes       # x + out tiles (double-buffered)
                           + tm_ * D * (4 + w_bytes)     # f32 accumulator + xn scratch
                           + 2 * tm_ * tf * 4))          # live h intermediate

    while tm > 8 and _est(tm) > budget:                  # shrink rows only if the budget demands
        tm = max(8, _round_up(tm // 2, 8))

    R_pad = _round_up(R, tm)
    if R_pad != R:                                       # pad rows instead of forcing tiny tiles
        x2d = jnp.pad(x2d, ((0, R_pad - R), (0, 0)))
    gamma2d = gamma.reshape(1, D)

    out = pl.pallas_call(
        functools.partial(_t5_ff_kernel, eps=eps),
        out_shape=jax.ShapeDtypeStruct((R_pad, D), x2d.dtype),
        grid_spec=pltpu.PrefetchScalarGridSpec(
            num_scalar_prefetch=0,
            grid=(R_pad // tm, F // tf),
            in_specs=[
                pl.BlockSpec((tm, D), lambda i, k: (i, 0)),   # x rows (not re-fetched over k)
                pl.BlockSpec((1, D), lambda i, k: (0, 0)),    # gamma
                pl.BlockSpec((D, tf), lambda i, k: (0, k)),   # wi column tile
                pl.BlockSpec((tf, D), lambda i, k: (k, 0)),   # wo row tile
            ],
            out_specs=pl.BlockSpec((tm, D), lambda i, k: (i, 0)),
            scratch_shapes=[pltpu.VMEM((tm, D), compute_dtype),   # normed activations
                            pltpu.VMEM((tm, D), jnp.float32)],    # f32 accumulator
        ),
        compiler_params=_mosaic_params(("parallel", "arbitrary"), _est(tm), budget),
    )(x2d, gamma2d, wi, wo)
    return out[:R] if R_pad != R else out


# ---------------------------------------------------------------------------
# T5Block wrapper
# ---------------------------------------------------------------------------
def t5_block(hidden_states, positions, mask, params, *, short_segment_size, num_heads,
             relative_attention_num_buckets, relative_attention_max_distance,
             eps=1e-6, block_rows=512):
    B, L, D = hidden_states.shape
    assert L % short_segment_size == 0, "sequence_length must be divisible by short_segment_size"
    S = short_segment_size
    nseg = L // S
    budget = _vmem_budget_bytes()

    x_seg = hidden_states.reshape(B * nseg, S, D)
    pos_seg = positions.reshape(B * nseg, S)
    mask_seg = mask.reshape(B * nseg, S)

    bias = _position_bias(pos_seg, pos_seg, params["rel_bias"],
                          relative_attention_num_buckets, relative_attention_max_distance,
                          hidden_states.dtype)

    # self-attention sublayer + residual
    x_seg = _t5_self_attention(x_seg, bias, mask_seg, params["ln_attn"], params["wq"],
                               params["wk"], params["wv"], params["wo_attn"],
                               eps=eps, num_heads=num_heads, budget=budget)

    # feed-forward sublayer + residual
    x2d = x_seg.reshape(B * L, D)
    x2d = _t5_ff(x2d, params["ln_ff"], params["wi"], params["wo_ff"], eps=eps,
                 budget=budget, block_rows=block_rows)
    return x2d.reshape(B, L, D)


# ---------------------------------------------------------------------------
# pure-JAX reference (mirrors the PyTorch math) for verification
# ---------------------------------------------------------------------------
def _reference_t5_block(hidden_states, positions, mask, params, *, short_segment_size,
                        num_heads, relative_attention_num_buckets,
                        relative_attention_max_distance, eps=1e-6):
    B, L, D = hidden_states.shape
    S = short_segment_size
    nseg = L // S
    x = hidden_states.reshape(B * nseg, S, D)
    pos = positions.reshape(B * nseg, S)
    msk = mask.reshape(B * nseg, S)

    def rmsnorm(h, w):
        hf = h.astype(jnp.float32)
        var = jnp.mean(hf * hf, axis=-1, keepdims=True)
        return w * (hf * jax.lax.rsqrt(var + eps))

    H = num_heads
    inner = params["wq"].shape[1]
    dk = inner // H

    # T5LayerSelfAttention
    xn = rmsnorm(x, params["ln_attn"]).astype(x.dtype)
    q = xn @ params["wq"]
    k = xn @ params["wk"]
    v = xn @ params["wv"]

    def split_heads(t):
        return t.reshape(t.shape[0], -1, H, dk).transpose(0, 2, 1, 3)

    qh, kh, vh = (split_heads(t).astype(jnp.float32) for t in (q, k, v))
    scores = jnp.einsum('bhqd,bhkd->bhqk', qh, kh)
    bias = _position_bias(pos, pos, params["rel_bias"],
                          relative_attention_num_buckets, relative_attention_max_distance,
                          jnp.float32)
    bias = bias - 1000.0 * (1.0 - msk[:, None, None, :].astype(jnp.float32))
    attn = jax.nn.softmax(scores + bias, axis=-1)
    ctx = jnp.einsum('bhqk,bhkd->bhqd', attn, vh)
    ctx = ctx.transpose(0, 2, 1, 3).reshape(x.shape[0], -1, inner).astype(x.dtype)
    x = ctx @ params["wo_attn"] + x

    # T5LayerFF (non-gated, relu)
    xn = rmsnorm(x, params["ln_ff"]).astype(x.dtype)
    h1 = jnp.maximum(xn @ params["wi"], 0.0)
    x = h1 @ params["wo_ff"] + x
    return x.reshape(B, L, D)


if __name__ == "__main__":
    # Small shapes consistent with the module.
    batch, seq = 2, 16
    d_model, d_ff = 32, 64
    num_heads, d_kv = 4, 8
    short_segment_size = 8
    num_buckets, max_distance = 32, 128
    eps = 1e-6
    inner = num_heads * d_kv

    key = jax.random.PRNGKey(0)
    kx, km, kq, kk, kv, ko, kb, ki, kf, kg1, kg2 = jax.random.split(key, 11)

    hidden = jax.random.normal(kx, (batch, seq, d_model), dtype=jnp.float32)
    positions = jnp.tile(jnp.arange(seq, dtype=jnp.int32)[None, :], (batch, 1))
    mask = (jax.random.uniform(km, (batch, seq)) > 0.25).astype(jnp.float32)

    params = {
        "ln_attn": 1.0 + 0.1 * jax.random.normal(kg1, (d_model,), dtype=jnp.float32),
        "ln_ff": 1.0 + 0.1 * jax.random.normal(kg2, (d_model,), dtype=jnp.float32),
        # Linear weights pre-transposed to (in_features, out_features).
        "wq": jax.random.normal(kq, (d_model, inner), jnp.float32) * d_model ** -0.5,
        "wk": jax.random.normal(kk, (d_model, inner), jnp.float32) * d_model ** -0.5,
        "wv": jax.random.normal(kv, (d_model, inner), jnp.float32) * d_model ** -0.5,
        "wo_attn": jax.random.normal(ko, (inner, d_model), jnp.float32) * inner ** -0.5,
        "rel_bias": 0.5 * jax.random.normal(kb, (num_buckets, num_heads), jnp.float32),
        "wi": jax.random.normal(ki, (d_model, d_ff), jnp.float32) * d_model ** -0.5,
        "wo_ff": jax.random.normal(kf, (d_ff, d_model), jnp.float32) * d_ff ** -0.5,
    }

    block_fn = functools.partial(
        t5_block,
        short_segment_size=short_segment_size, num_heads=num_heads,
        relative_attention_num_buckets=num_buckets,
        relative_attention_max_distance=max_distance, eps=eps)

    out = jax.jit(block_fn)(hidden, positions, mask, params)
    out = jax.block_until_ready(out)

    with jax.default_matmul_precision("highest"):
        ref = _reference_t5_block(
            hidden, positions, mask, params,
            short_segment_size=short_segment_size, num_heads=num_heads,
            relative_attention_num_buckets=num_buckets,
            relative_attention_max_distance=max_distance, eps=eps)

    assert out.shape == hidden.shape
    max_err = float(jnp.max(jnp.abs(out - ref)))
    # Slightly looser tolerance than f32 exact: softmax uses the EUP approx reciprocal.
    assert jnp.allclose(out, ref, atol=5e-3, rtol=5e-3), f"mismatch vs reference: {max_err}"

    print("KERNEL_OK")
</pallas_src>

<mosaic_0001>
module attributes {stable_mosaic.version = 11 : i64} {
  func.func @_t5_ff_kernel(%arg0: i32, %arg1: i32, %arg2: memref<32x32xf32, #tpu.memory_space<vmem>>, %arg3: memref<1x32xf32, #tpu.memory_space<vmem>>, %arg4: memref<32x64xf32, #tpu.memory_space<vmem>>, %arg5: memref<64x32xf32, #tpu.memory_space<vmem>>, %arg6: memref<32x32xf32, #tpu.memory_space<vmem>>, %arg7: memref<32x32xf32, #tpu.memory_space<vmem>>, %arg8: memref<32x32xf32, #tpu.memory_space<vmem>>) attributes {dimension_semantics = [#tpu.dimension_semantics<parallel>, #tpu.dimension_semantics<arbitrary>], iteration_bounds = array<i64: 1, 1>, scalar_prefetch = 0 : i64, scratch_operands = 2 : i64, tpu.core_type = #tpu.core_type<tc>, window_params = [{transform_indices = @transform_0, window_bounds = array<i64: 32, 32>}, {pipeline_mode = #tpu.pipeline_mode<synchronous>, transform_indices = @transform_1, window_bounds = array<i64: 1, 32>}, {transform_indices = @transform_2, window_bounds = array<i64: 32, 64>}, {transform_indices = @transform_3, window_bounds = array<i64: 64, 32>}, {transform_indices = @transform_4, window_bounds = array<i64: 32, 32>}]} {
    %c0_i32 = arith.constant 0 : i32
    %0 = arith.cmpi eq, %arg1, %c0_i32 : i32
    %1 = arith.extui %0 : i1 to i32
    %c0_i32_0 = arith.constant 0 : i32
    %2 = arith.cmpi ne, %1, %c0_i32_0 : i32
    scf.if %2 {
      %c0_14 = arith.constant 0 : index
      %c0_15 = arith.constant 0 : index
      %16 = vector.load %arg2[%c0_14, %c0_15] : memref<32x32xf32, #tpu.memory_space<vmem>>, vector<32x32xf32>
      %17 = arith.mulf %16, %16 : vector<32x32xf32>
      %cst_16 = arith.constant dense<0.000000e+00> : vector<32xf32>
      %18 = vector.multi_reduction <add>, %17, %cst_16 [1] : vector<32x32xf32> to vector<32xf32>
      %19 = vector.shape_cast %18 : vector<32xf32> to vector<32x1xf32>
      %cst_17 = arith.constant 3.200000e+01 : f32
      %20 = vector.broadcast %cst_17 : f32 to vector<32x1xf32>
      %21 = arith.divf %19, %20 : vector<32x1xf32>
      %c0_18 = arith.constant 0 : index
      %c0_19 = arith.constant 0 : index
      %22 = vector.load %arg3[%c0_18, %c0_19] : memref<1x32xf32, #tpu.memory_space<vmem>>, vector<1x32xf32>
      %cst_20 = arith.constant 9.99999997E-7 : f32
      %23 = vector.broadcast %cst_20 : f32 to vector<32x1xf32>
      %24 = arith.addf %21, %23 : vector<32x1xf32>
      %25 = math.rsqrt %24 : vector<32x1xf32>
      %26 = vector.broadcast %25 : vector<32x1xf32> to vector<32x32xf32>
      %27 = arith.mulf %16, %26 : vector<32x32xf32>
      %28 = vector.broadcast %22 : vector<1x32xf32> to vector<32x32xf32>
      %29 = arith.mulf %28, %27 : vector<32x32xf32>
      %c0_21 = arith.constant 0 : index
      %c0_22 = arith.constant 0 : index
      %30 = vector.load %arg7[%c0_21, %c0_22] : memref<32x32xf32, #tpu.memory_space<vmem>>, vector<32x32xf32>
      tpu.vector_store %arg7[%c0_21, %c0_22], %29 {strides = array<i32>} : memref<32x32xf32, #tpu.memory_space<vmem>>, vector<32x32xf32>,
      %cst_23 = arith.constant 0.000000e+00 : f32
      %31 = vector.broadcast %cst_23 : f32 to vector<32x32xf32>
      %c0_24 = arith.constant 0 : index
      %c0_25 = arith.constant 0 : index
      %32 = vector.load %arg8[%c0_24, %c0_25] : memref<32x32xf32, #tpu.memory_space<vmem>>, vector<32x32xf32>
      tpu.vector_store %arg8[%c0_24, %c0_25], %31 {strides = array<i32>} : memref<32x32xf32, #tpu.memory_space<vmem>>, vector<32x32xf32>,
    } else {
    }
    %c0 = arith.constant 0 : index
    %c0_1 = arith.constant 0 : index
    %3 = vector.load %arg7[%c0, %c0_1] : memref<32x32xf32, #tpu.memory_space<vmem>>, vector<32x32xf32>
    %c0_2 = arith.constant 0 : index
    %c0_3 = arith.constant 0 : index
    %4 = vector.load %arg4[%c0_2, %c0_3] : memref<32x64xf32, #tpu.memory_space<vmem>>, vector<32x64xf32>
    %cst = arith.constant dense<0.000000e+00> : vector<32x64xf32>
    %5 = tpu.matmul %3, %4, %cst {dimension_numbers = #tpu.dot_dimension_numbers<[1], [0], [0], [1], [0, 0, 1, 1], [], []>} : vector<32x32xf32>, vector<32x64xf32>, vector<32x64xf32> -> vector<32x64xf32>
    %cst_4 = arith.constant 0.000000e+00 : f32
    %6 = vector.broadcast %cst_4 : f32 to vector<32x64xf32>
    %7 = arith.maximumf %5, %6 : vector<32x64xf32>
    %c0_5 = arith.constant 0 : index
    %c0_6 = arith.constant 0 : index
    %8 = vector.load %arg8[%c0_5, %c0_6] : memref<32x32xf32, #tpu.memory_space<vmem>>, vector<32x32xf32>
    %c0_7 = arith.constant 0 : index
    %c0_8 = arith.constant 0 : index
    %9 = vector.load %arg5[%c0_7, %c0_8] : memref<64x32xf32, #tpu.memory_space<vmem>>, vector<64x32xf32>
    %cst_9 = arith.constant dense<0.000000e+00> : vector<32x32xf32>
    %10 = tpu.matmul %7, %9, %cst_9 {dimension_numbers = #tpu.dot_dimension_numbers<[1], [0], [0], [1], [0, 0, 1, 1], [], []>} : vector<32x64xf32>, vector<64x32xf32>, vector<32x32xf32> -> vector<32x32xf32>
    %11 = arith.addf %8, %10 : vector<32x32xf32>
    %c0_10 = arith.constant 0 : index
    %c0_11 = arith.constant 0 : index
    %12 = vector.load %arg8[%c0_10, %c0_11] : memref<32x32xf32, #tpu.memory_space<vmem>>, vector<32x32xf32>
    tpu.vector_store %arg8[%c0_10, %c0_11], %11 {strides = array<i32>} : memref<32x32xf32, #tpu.memory_space<vmem>>, vector<32x32xf32>,
    %c0_i32_12 = arith.constant 0 : i32
    %13 = arith.cmpi eq, %arg1, %c0_i32_12 : i32
    %14 = arith.extui %13 : i1 to i32
    %c0_i32_13 = arith.constant 0 : i32
    %15 = arith.cmpi ne, %14, %c0_i32_13 : i32
    scf.if %15 {
      %c0_14 = arith.constant 0 : index
      %c0_15 = arith.constant 0 : index
      %16 = vector.load %arg8[%c0_14, %c0_15] : memref<32x32xf32, #tpu.memory_space<vmem>>, vector<32x32xf32>
      %c0_16 = arith.constant 0 : index
      %c0_17 = arith.constant 0 : index
      %17 = vector.load %arg2[%c0_16, %c0_17] : memref<32x32xf32, #tpu.memory_space<vmem>>, vector<32x32xf32>
      %18 = arith.addf %16, %17 : vector<32x32xf32>
      %c0_18 = arith.constant 0 : index
      %c0_19 = arith.constant 0 : index
      %19 = vector.load %arg6[%c0_18, %c0_19] : memref<32x32xf32, #tpu.memory_space<vmem>>, vector<32x32xf32>
      tpu.vector_store %arg6[%c0_18, %c0_19], %18 {strides = array<i32>} : memref<32x32xf32, #tpu.memory_space<vmem>>, vector<32x32xf32>,
    } else {
    }
    return
  }
  func.func @transform_0(%arg0: i32, %arg1: i32) -> (i32, i32) {
    %c0_i32 = arith.constant 0 : i32
    %c0_i32_0 = arith.constant 0 : i32
    return %arg0, %c0_i32 : i32, i32
  }
  func.func @transform_1(%arg0: i32, %arg1: i32) -> (i32, i32) {
    %c0_i32 = arith.constant 0 : i32
    %c0_i32_0 = arith.constant 0 : i32
    %c0_i32_1 = arith.constant 0 : i32
    return %c0_i32, %c0_i32_0 : i32, i32
  }
  func.func @transform_2(%arg0: i32, %arg1: i32) -> (i32, i32) {
    %c0_i32 = arith.constant 0 : i32
    %c0_i32_0 = arith.constant 0 : i32
    return %c0_i32, %arg1 : i32, i32
  }
  func.func @transform_3(%arg0: i32, %arg1: i32) -> (i32, i32) {
    %c0_i32 = arith.constant 0 : i32
    %c0_i32_0 = arith.constant 0 : i32
    return %arg1, %c0_i32 : i32, i32
  }
  func.func @transform_4(%arg0: i32, %arg1: i32) -> (i32, i32) {
    %c0_i32 = arith.constant 0 : i32
    %c0_i32_0 = arith.constant 0 : i32
    return %arg0, %c0_i32 : i32, i32
  }
}

module attributes {stable_mosaic.version = 11 : i64} {
  func.func @_t5_attn_kernel(%arg0: i32, %arg1: memref<4x8x32xf32, #tpu.memory_space<vmem>>, %arg2: memref<4x4x8x8xf32, #tpu.memory_space<vmem>>, %arg3: memref<4x1x8xf32, #tpu.memory_space<vmem>>, %arg4: memref<1x32xf32, #tpu.memory_space<vmem>>, %arg5: memref<32x32xf32, #tpu.memory_space<vmem>>, %arg6: memref<32x32xf32, #tpu.memory_space<vmem>>, %arg7: memref<32x32xf32, #tpu.memory_space<vmem>>, %arg8: memref<32x32xf32, #tpu.memory_space<vmem>>, %arg9: memref<4x8x32xf32, #tpu.memory_space<vmem>>) attributes {dimension_semantics = [#tpu.dimension_semantics<parallel>], iteration_bounds = array<i64: 1>, scalar_prefetch = 0 : i64, scratch_operands = 0 : i64, tpu.core_type = #tpu.core_type<tc>, window_params = [{transform_indices = @transform_0, window_bounds = array<i64: 4, 8, 32>}, {transform_indices = @transform_1, window_bounds = array<i64: 4, 4, 8, 8>}, {transform_indices = @transform_2, window_bounds = array<i64: 4, 1, 8>}, {pipeline_mode = #tpu.pipeline_mode<synchronous>, transform_indices = @transform_3, window_bounds = array<i64: 1, 32>}, {pipeline_mode = #tpu.pipeline_mode<synchronous>, transform_indices = @transform_4, window_bounds = array<i64: 32, 32>}, {pipeline_mode = #tpu.pipeline_mode<synchronous>, transform_indices = @transform_5, window_bounds = array<i64: 32, 32>}, {pipeline_mode = #tpu.pipeline_mode<synchronous>, transform_indices = @transform_6, window_bounds = array<i64: 32, 32>}, {pipeline_mode = #tpu.pipeline_mode<synchronous>, transform_indices = @transform_7, window_bounds = array<i64: 32, 32>}, {transform_indices = @transform_8, window_bounds = array<i64: 4, 8, 32>}]} {
    %c0 = arith.constant 0 : index
    %c0_0 = arith.constant 0 : index
    %c0_1 = arith.constant 0 : index
    %0 = vector.load %arg1[%c0, %c0_0, %c0_1] : memref<4x8x32xf32, #tpu.memory_space<vmem>>, vector<4x8x32xf32>
    %1 = arith.mulf %0, %0 : vector<4x8x32xf32>
    %cst = arith.constant dense<0.000000e+00> : vector<4x8xf32>
    %2 = vector.multi_reduction <add>, %1, %cst [2] : vector<4x8x32xf32> to vector<4x8xf32>
    %3 = vector.shape_cast %2 : vector<4x8xf32> to vector<4x8x1xf32>
    %cst_2 = arith.constant 3.200000e+01 : f32
    %4 = vector.broadcast %cst_2 : f32 to vector<4x8x1xf32>
    %5 = arith.divf %3, %4 : vector<4x8x1xf32>
    %c0_3 = arith.constant 0 : index
    %c0_4 = arith.constant 0 : index
    %6 = vector.load %arg4[%c0_3, %c0_4] : memref<1x32xf32, #tpu.memory_space<vmem>>, vector<1x32xf32>
    %cst_5 = arith.constant 9.99999997E-7 : f32
    %7 = vector.broadcast %cst_5 : f32 to vector<4x8x1xf32>
    %8 = arith.addf %5, %7 : vector<4x8x1xf32>
    %9 = math.rsqrt %8 : vector<4x8x1xf32>
    %10 = vector.broadcast %9 : vector<4x8x1xf32> to vector<4x8x32xf32>
    %11 = arith.mulf %0, %10 : vector<4x8x32xf32>
    %12 = vector.shape_cast %6 : vector<1x32xf32> to vector<1x1x32xf32>
    %13 = vector.broadcast %12 : vector<1x1x32xf32> to vector<4x8x32xf32>
    %14 = arith.mulf %13, %11 : vector<4x8x32xf32>
    %15 = vector.shape_cast %14 : vector<4x8x32xf32> to vector<32x32xf32>
    %c0_6 = arith.constant 0 : index
    %c0_7 = arith.constant 0 : index
    %16 = vector.load %arg5[%c0_6, %c0_7] : memref<32x32xf32, #tpu.memory_space<vmem>>, vector<32x32xf32>
    %cst_8 = arith.constant dense<0.000000e+00> : vector<32x32xf32>
    %17 = tpu.matmul %15, %16, %cst_8 {dimension_numbers = #tpu.dot_dimension_numbers<[1], [0], [0], [1], [0, 0, 1, 1], [], []>} : vector<32x32xf32>, vector<32x32xf32>, vector<32x32xf32> -> vector<32x32xf32>
    %c0_9 = arith.constant 0 : index
    %c0_10 = arith.constant 0 : index
    %18 = vector.load %arg6[%c0_9, %c0_10] : memref<32x32xf32, #tpu.memory_space<vmem>>, vector<32x32xf32>
    %cst_11 = arith.constant dense<0.000000e+00> : vector<32x32xf32>
    %19 = tpu.matmul %15, %18, %cst_11 {dimension_numbers = #tpu.dot_dimension_numbers<[1], [0], [0], [1], [0, 0, 1, 1], [], []>} : vector<32x32xf32>, vector<32x32xf32>, vector<32x32xf32> -> vector<32x32xf32>
    %c0_12 = arith.constant 0 : index
    %c0_13 = arith.constant 0 : index
    %20 = vector.load %arg7[%c0_12, %c0_13] : memref<32x32xf32, #tpu.memory_space<vmem>>, vector<32x32xf32>
    %cst_14 = arith.constant dense<0.000000e+00> : vector<32x32xf32>
    %21 = tpu.matmul %15, %20, %cst_14 {dimension_numbers = #tpu.dot_dimension_numbers<[1], [0], [0], [1], [0, 0, 1, 1], [], []>} : vector<32x32xf32>, vector<32x32xf32>, vector<32x32xf32> -> vector<32x32xf32>
    %c0_15 = arith.constant 0 : index
    %c0_16 = arith.constant 0 : index
    %c0_17 = arith.constant 0 : index
    %22 = vector.load %arg3[%c0_15, %c0_16, %c0_17] : memref<4x1x8xf32, #tpu.memory_space<vmem>>, vector<4x1x8xf32>
    %cst_18 = arith.constant 1.000000e+00 : f32
    %23 = vector.broadcast %cst_18 : f32 to vector<4x1x8xf32>
    %24 = arith.subf %23, %22 : vector<4x1x8xf32>
    %cst_19 = arith.constant -1.000000e+03 : f32
    %25 = vector.broadcast %cst_19 : f32 to vector<4x1x8xf32>
    %26 = arith.mulf %25, %24 : vector<4x1x8xf32>
    %27 = vector.extract_strided_slice %17 {offsets = [0, 0], sizes = [32, 8], strides = [1, 1]} : vector<32x32xf32> to vector<32x8xf32>
    %28 = vector.shape_cast %27 : vector<32x8xf32> to vector<4x8x8xf32>
    %29 = vector.extract_strided_slice %19 {offsets = [0, 0], sizes = [32, 8], strides = [1, 1]} : vector<32x32xf32> to vector<32x8xf32>
    %30 = vector.shape_cast %29 : vector<32x8xf32> to vector<4x8x8xf32>
    %31 = vector.extract_strided_slice %21 {offsets = [0, 0], sizes = [32, 8], strides = [1, 1]} : vector<32x32xf32> to vector<32x8xf32>
    %32 = vector.shape_cast %31 : vector<32x8xf32> to vector<4x8x8xf32>
    "tpu.trace_start"() <{level = 10 : i32, message = "gqd,gkd->gqk"}> : () -> ()
    %cst_20 = arith.constant dense<0.000000e+00> : vector<4x8x8xf32>
    %33 = tpu.matmul %28, %30, %cst_20 {dimension_numbers = #tpu.dot_dimension_numbers<[2], [2], [1], [1], [0, 0, 0, 1, 1, 1], [0], [0]>} : vector<4x8x8xf32>, vector<4x8x8xf32>, vector<4x8x8xf32> -> vector<4x8x8xf32>
    "tpu.trace_stop"() : () -> ()
    %c0_21 = arith.constant 0 : index
    %c0_22 = arith.constant 0 : index
    %c0_23 = arith.constant 0 : index
    %c0_24 = arith.constant 0 : index
    %34 = vector.load %arg2[%c0_21, %c0_22, %c0_23, %c0_24] : memref<4x4x8x8xf32, #tpu.memory_space<vmem>>, vector<4x1x8x8xf32>
    %35 = vector.shape_cast %34 : vector<4x1x8x8xf32> to vector<4x8x8xf32>
    %36 = arith.addf %33, %35 : vector<4x8x8xf32>
    %37 = vector.broadcast %26 : vector<4x1x8xf32> to vector<4x8x8xf32>
    %38 = arith.addf %36, %37 : vector<4x8x8xf32>
    %cst_25 = arith.constant dense<0xFF800000> : vector<4x8xf32>
    %39 = vector.multi_reduction <maximumf>, %38, %cst_25 [2] : vector<4x8x8xf32> to vector<4x8xf32>
    %40 = vector.shape_cast %39 : vector<4x8xf32> to vector<4x8x1xf32>
    %41 = vector.broadcast %40 : vector<4x8x1xf32> to vector<4x8x8xf32>
    %42 = arith.subf %38, %41 : vector<4x8x8xf32>
    %43 = math.exp %42 : vector<4x8x8xf32>
    %cst_26 = arith.constant dense<0.000000e+00> : vector<4x8xf32>
    %44 = vector.multi_reduction <add>, %43, %cst_26 [2] : vector<4x8x8xf32> to vector<4x8xf32>
    %45 = vector.shape_cast %44 : vector<4x8xf32> to vector<4x8x1xf32>
    %46 = tpu.reciprocal %45 {approx = true} : vector<4x8x1xf32> -> vector<4x8x1xf32>
    %47 = vector.broadcast %46 : vector<4x8x1xf32> to vector<4x8x8xf32>
    %48 = arith.mulf %43, %47 : vector<4x8x8xf32>
    "tpu.trace_start"() <{level = 10 : i32, message = "gqk,gkd->gqd"}> : () -> ()
    %cst_27 = arith.constant dense<0.000000e+00> : vector<4x8x8xf32>
    %49 = tpu.matmul %48, %32, %cst_27 {dimension_numbers = #tpu.dot_dimension_numbers<[2], [1], [1], [2], [0, 0, 0, 1, 1, 2], [0], [0]>} : vector<4x8x8xf32>, vector<4x8x8xf32>, vector<4x8x8xf32> -> vector<4x8x8xf32>
    "tpu.trace_stop"() : () -> ()
    %50 = vector.shape_cast %49 : vector<4x8x8xf32> to vector<32x8xf32>
    %51 = vector.extract_strided_slice %17 {offsets = [0, 8], sizes = [32, 8], strides = [1, 1]} : vector<32x32xf32> to vector<32x8xf32>
    %52 = vector.shape_cast %51 : vector<32x8xf32> to vector<4x8x8xf32>
    %53 = vector.extract_strided_slice %19 {offsets = [0, 8], sizes = [32, 8], strides = [1, 1]} : vector<32x32xf32> to vector<32x8xf32>
    %54 = vector.shape_cast %53 : vector<32x8xf32> to vector<4x8x8xf32>
    %55 = vector.extract_strided_slice %21 {offsets = [0, 8], sizes = [32, 8], strides = [1, 1]} : vector<32x32xf32> to vector<32x8xf32>
    %56 = vector.shape_cast %55 : vector<32x8xf32> to vector<4x8x8xf32>
    "tpu.trace_start"() <{level = 10 : i32, message = "gqd,gkd->gqk"}> : () -> ()
    %cst_28 = arith.constant dense<0.000000e+00> : vector<4x8x8xf32>
    %57 = tpu.matmul %52, %54, %cst_28 {dimension_numbers = #tpu.dot_dimension_numbers<[2], [2], [1], [1], [0, 0, 0, 1, 1, 1], [0], [0]>} : vector<4x8x8xf32>, vector<4x8x8xf32>, vector<4x8x8xf32> -> vector<4x8x8xf32>
    "tpu.trace_stop"() : () -> ()
    %c0_29 = arith.constant 0 : index
    %c1 = arith.constant 1 : index
    %c0_30 = arith.constant 0 : index
    %c0_31 = arith.constant 0 : index
    %58 = vector.load %arg2[%c0_29, %c1, %c0_30, %c0_31] : memref<4x4x8x8xf32, #tpu.memory_space<vmem>>, vector<4x1x8x8xf32>
    %59 = vector.shape_cast %58 : vector<4x1x8x8xf32> to vector<4x8x8xf32>
    %60 = arith.addf %57, %59 : vector<4x8x8xf32>
    %61 = vector.broadcast %26 : vector<4x1x8xf32> to vector<4x8x8xf32>
    %62 = arith.addf %60, %61 : vector<4x8x8xf32>
    %cst_32 = arith.constant dense<0xFF800000> : vector<4x8xf32>
    %63 = vector.multi_reduction <maximumf>, %62, %cst_32 [2] : vector<4x8x8xf32> to vector<4x8xf32>
    %64 = vector.shape_cast %63 : vector<4x8xf32> to vector<4x8x1xf32>
    %65 = vector.broadcast %64 : vector<4x8x1xf32> to vector<4x8x8xf32>
    %66 = arith.subf %62, %65 : vector<4x8x8xf32>
    %67 = math.exp %66 : vector<4x8x8xf32>
    %cst_33 = arith.constant dense<0.000000e+00> : vector<4x8xf32>
    %68 = vector.multi_reduction <add>, %67, %cst_33 [2] : vector<4x8x8xf32> to vector<4x8xf32>
    %69 = vector.shape_cast %68 : vector<4x8xf32> to vector<4x8x1xf32>
    %70 = tpu.reciprocal %69 {approx = true} : vector<4x8x1xf32> -> vector<4x8x1xf32>
    %71 = vector.broadcast %70 : vector<4x8x1xf32> to vector<4x8x8xf32>
    %72 = arith.mulf %67, %71 : vector<4x8x8xf32>
    "tpu.trace_start"() <{level = 10 : i32, message = "gqk,gkd->gqd"}> : () -> ()
    %cst_34 = arith.constant dense<0.000000e+00> : vector<4x8x8xf32>
    %73 = tpu.matmul %72, %56, %cst_34 {dimension_numbers = #tpu.dot_dimension_numbers<[2], [1], [1], [2], [0, 0, 0, 1, 1, 2], [0], [0]>} : vector<4x8x8xf32>, vector<4x8x8xf32>, vector<4x8x8xf32> -> vector<4x8x8xf32>
    "tpu.trace_stop"() : () -> ()
    %74 = vector.shape_cast %73 : vector<4x8x8xf32> to vector<32x8xf32>
    %75 = vector.extract_strided_slice %17 {offsets = [0, 16], sizes = [32, 8], strides = [1, 1]} : vector<32x32xf32> to vector<32x8xf32>
    %76 = vector.shape_cast %75 : vector<32x8xf32> to vector<4x8x8xf32>
    %77 = vector.extract_strided_slice %19 {offsets = [0, 16], sizes = [32, 8], strides = [1, 1]} : vector<32x32xf32> to vector<32x8xf32>
    %78 = vector.shape_cast %77 : vector<32x8xf32> to vector<4x8x8xf32>
    %79 = vector.extract_strided_slice %21 {offsets = [0, 16], sizes = [32, 8], strides = [1, 1]} : vector<32x32xf32> to vector<32x8xf32>
    %80 = vector.shape_cast %79 : vector<32x8xf32> to vector<4x8x8xf32>
    "tpu.trace_start"() <{level = 10 : i32, message = "gqd,gkd->gqk"}> : () -> ()
    %cst_35 = arith.constant dense<0.000000e+00> : vector<4x8x8xf32>
    %81 = tpu.matmul %76, %78, %cst_35 {dimension_numbers = #tpu.dot_dimension_numbers<[2], [2], [1], [1], [0, 0, 0, 1, 1, 1], [0], [0]>} : vector<4x8x8xf32>, vector<4x8x8xf32>, vector<4x8x8xf32> -> vector<4x8x8xf32>
    "tpu.trace_stop"() : () -> ()
    %c0_36 = arith.constant 0 : index
    %c2 = arith.constant 2 : index
    %c0_37 = arith.constant 0 : index
    %c0_38 = arith.constant 0 : index
    %82 = vector.load %arg2[%c0_36, %c2, %c0_37, %c0_38] : memref<4x4x8x8xf32, #tpu.memory_space<vmem>>, vector<4x1x8x8xf32>
    %83 = vector.shape_cast %82 : vector<4x1x8x8xf32> to vector<4x8x8xf32>
    %84 = arith.addf %81, %83 : vector<4x8x8xf32>
    %85 = vector.broadcast %26 : vector<4x1x8xf32> to vector<4x8x8xf32>
    %86 = arith.addf %84, %85 : vector<4x8x8xf32>
    %cst_39 = arith.constant dense<0xFF800000> : vector<4x8xf32>
    %87 = vector.multi_reduction <maximumf>, %86, %cst_39 [2] : vector<4x8x8xf32> to vector<4x8xf32>
    %88 = vector.shape_cast %87 : vector<4x8xf32> to vector<4x8x1xf32>
    %89 = vector.broadcast %88 : vector<4x8x1xf32> to vector<4x8x8xf32>
    %90 = arith.subf %86, %89 : vector<4x8x8xf32>
    %91 = math.exp %90 : vector<4x8x8xf32>
    %cst_40 = arith.constant dense<0.000000e+00> : vector<4x8xf32>
    %92 = vector.multi_reduction <add>, %91, %cst_40 [2] : vector<4x8x8xf32> to vector<4x8xf32>
    %93 = vector.shape_cast %92 : vector<4x8xf32> to vector<4x8x1xf32>
    %94 = tpu.reciprocal %93 {approx = true} : vector<4x8x1xf32> -> vector<4x8x1xf32>
    %95 = vector.broadcast %94 : vector<4x8x1xf32> to vector<4x8x8xf32>
    %96 = arith.mulf %91, %95 : vector<4x8x8xf32>
    "tpu.trace_start"() <{level = 10 : i32, message = "gqk,gkd->gqd"}> : () -> ()
    %cst_41 = arith.constant dense<0.000000e+00> : vector<4x8x8xf32>
    %97 = tpu.matmul %96, %80, %cst_41 {dimension_numbers = #tpu.dot_dimension_numbers<[2], [1], [1], [2], [0, 0, 0, 1, 1, 2], [0], [0]>} : vector<4x8x8xf32>, vector<4x8x8xf32>, vector<4x8x8xf32> -> vector<4x8x8xf32>
    "tpu.trace_stop"() : () -> ()
    %98 = vector.shape_cast %97 : vector<4x8x8xf32> to vector<32x8xf32>
    %99 = vector.extract_strided_slice %17 {offsets = [0, 24], sizes = [32, 8], strides = [1, 1]} : vector<32x32xf32> to vector<32x8xf32>
    %100 = vector.shape_cast %99 : vector<32x8xf32> to vector<4x8x8xf32>
    %101 = vector.extract_strided_slice %19 {offsets = [0, 24], sizes = [32, 8], strides = [1, 1]} : vector<32x32xf32> to vector<32x8xf32>
    %102 = vector.shape_cast %101 : vector<32x8xf32> to vector<4x8x8xf32>
    %103 = vector.extract_strided_slice %21 {offsets = [0, 24], sizes = [32, 8], strides = [1, 1]} : vector<32x32xf32> to vector<32x8xf32>
    %104 = vector.shape_cast %103 : vector<32x8xf32> to vector<4x8x8xf32>
    "tpu.trace_start"() <{level = 10 : i32, message = "gqd,gkd->gqk"}> : () -> ()
    %cst_42 = arith.constant dense<0.000000e+00> : vector<4x8x8xf32>
    %105 = tpu.matmul %100, %102, %cst_42 {dimension_numbers = #tpu.dot_dimension_numbers<[2], [2], [1], [1], [0, 0, 0, 1, 1, 1], [0], [0]>} : vector<4x8x8xf32>, vector<4x8x8xf32>, vector<4x8x8xf32> -> vector<4x8x8xf32>
    "tpu.trace_stop"() : () -> ()
    %c0_43 = arith.constant 0 : index
    %c3 = arith.constant 3 : index
    %c0_44 = arith.constant 0 : index
    %c0_45 = arith.constant 0 : index
    %106 = vector.load %arg2[%c0_43, %c3, %c0_44, %c0_45] : memref<4x4x8x8xf32, #tpu.memory_space<vmem>>, vector<4x1x8x8xf32>
    %107 = vector.shape_cast %106 : vector<4x1x8x8xf32> to vector<4x8x8xf32>
    %108 = arith.addf %105, %107 : vector<4x8x8xf32>
    %109 = vector.broadcast %26 : vector<4x1x8xf32> to vector<4x8x8xf32>
    %110 = arith.addf %108, %109 : vector<4x8x8xf32>
    %cst_46 = arith.constant dense<0xFF800000> : vector<4x8xf32>
    %111 = vector.multi_reduction <maximumf>, %110, %cst_46 [2] : vector<4x8x8xf32> to vector<4x8xf32>
    %112 = vector.shape_cast %111 : vector<4x8xf32> to vector<4x8x1xf32>
    %113 = vector.broadcast %112 : vector<4x8x1xf32> to vector<4x8x8xf32>
    %114 = arith.subf %110, %113 : vector<4x8x8xf32>
    %115 = math.exp %114 : vector<4x8x8xf32>
    %cst_47 = arith.constant dense<0.000000e+00> : vector<4x8xf32>
    %116 = vector.multi_reduction <add>, %115, %cst_47 [2] : vector<4x8x8xf32> to vector<4x8xf32>
    %117 = vector.shape_cast %116 : vector<4x8xf32> to vector<4x8x1xf32>
    %118 = tpu.reciprocal %117 {approx = true} : vector<4x8x1xf32> -> vector<4x8x1xf32>
    %119 = vector.broadcast %118 : vector<4x8x1xf32> to vector<4x8x8xf32>
    %120 = arith.mulf %115, %119 : vector<4x8x8xf32>
    "tpu.trace_start"() <{level = 10 : i32, message = "gqk,gkd->gqd"}> : () -> ()
    %cst_48 = arith.constant dense<0.000000e+00> : vector<4x8x8xf32>
    %121 = tpu.matmul %120, %104, %cst_48 {dimension_numbers = #tpu.dot_dimension_numbers<[2], [1], [1], [2], [0, 0, 0, 1, 1, 2], [0], [0]>} : vector<4x8x8xf32>, vector<4x8x8xf32>, vector<4x8x8xf32> -> vector<4x8x8xf32>
    "tpu.trace_stop"() : () -> ()
    %122 = vector.shape_cast %121 : vector<4x8x8xf32> to vector<32x8xf32>
    %123 = tpu.concatenate %50, %74, %98, %122 in 1 : vector<32x8xf32>, vector<32x8xf32>, vector<32x8xf32>, vector<32x8xf32> -> vector<32x32xf32>
    %c0_49 = arith.constant 0 : index
    %c0_50 = arith.constant 0 : index
    %124 = vector.load %arg8[%c0_49, %c0_50] : memref<32x32xf32, #tpu.memory_space<vmem>>, vector<32x32xf32>
    %cst_51 = arith.constant dense<0.000000e+00> : vector<32x32xf32>
    %125 = tpu.matmul %123, %124, %cst_51 {dimension_numbers = #tpu.dot_dimension_numbers<[1], [0], [0], [1], [0, 0, 1, 1], [], []>} : vector<32x32xf32>, vector<32x32xf32>, vector<32x32xf32> -> vector<32x32xf32>
    %126 = vector.shape_cast %125 : vector<32x32xf32> to vector<4x8x32xf32>
    %c0_52 = arith.constant 0 : index
    %c0_53 = arith.constant 0 : index
    %c0_54 = arith.constant 0 : index
    %127 = vector.load %arg1[%c0_52, %c0_53, %c0_54] : memref<4x8x32xf32, #tpu.memory_space<vmem>>, vector<4x8x32xf32>
    %128 = arith.addf %126, %127 : vector<4x8x32xf32>
    %c0_55 = arith.constant 0 : index
    %c0_56 = arith.constant 0 : index
    %c0_57 = arith.constant 0 : index
    %129 = vector.load %arg9[%c0_55, %c0_56, %c0_57] : memref<4x8x32xf32, #tpu.memory_space<vmem>>, vector<4x8x32xf32>
    tpu.vector_store %arg9[%c0_55, %c0_56, %c0_57], %128 {strides = array<i32>} : memref<4x8x32xf32, #tpu.memory_space<vmem>>, vector<4x8x32xf32>,
    return
  }
  func.func @transform_0(%arg0: i32) -> (i32, i32, i32) {
    %c0_i32 = arith.constant 0 : i32
    %c0_i32_0 = arith.constant 0 : i32
    %c0_i32_1 = arith.constant 0 : i32
    return %arg0, %c0_i32, %c0_i32_0 : i32, i32, i32
  }
  func.func @transform_1(%arg0: i32) -> (i32, i32, i32, i32) {
    %c0_i32 = arith.constant 0 : i32
    %c0_i32_0 = arith.constant 0 : i32
    %c0_i32_1 = arith.constant 0 : i32
    %c0_i32_2 = arith.constant 0 : i32
    return %arg0, %c0_i32, %c0_i32_0, %c0_i32_1 : i32, i32, i32, i32
  }
  func.func @transform_2(%arg0: i32) -> (i32, i32, i32) {
    %c0_i32 = arith.constant 0 : i32
    %c0_i32_0 = arith.constant 0 : i32
    %c0_i32_1 = arith.constant 0 : i32
    return %arg0, %c0_i32, %c0_i32_0 : i32, i32, i32
  }
  func.func @transform_3(%arg0: i32) -> (i32, i32) {
    %c0_i32 = arith.constant 0 : i32
    %c0_i32_0 = arith.constant 0 : i32
    %c0_i32_1 = arith.constant 0 : i32
    return %c0_i32, %c0_i32_0 : i32, i32
  }
  func.func @transform_4(%arg0: i32) -> (i32, i32) {
    %c0_i32 = arith.constant 0 : i32
    %c0_i32_0 = arith.constant 0 : i32
    %c0_i32_1 = arith.constant 0 : i32
    return %c0_i32, %c0_i32_0 : i32, i32
  }
  func.func @transform_5(%arg0: i32) -> (i32, i32) {
    %c0_i32 = arith.constant 0 : i32
    %c0_i32_0 = arith.constant 0 : i32
    %c0_i32_1 = arith.constant 0 : i32
    return %c0_i32, %c0_i32_0 : i32, i32
  }
  func.func @transform_6(%arg0: i32) -> (i32, i32) {
    %c0_i32 = arith.constant 0 : i32
    %c0_i32_0 = arith.constant 0 : i32
    %c0_i32_1 = arith.constant 0 : i32
    return %c0_i32, %c0_i32_0 : i32, i32
  }
  func.func @transform_7(%arg0: i32) -> (i32, i32) {
    %c0_i32 = arith.constant 0 : i32
    %c0_i32_0 = arith.constant 0 : i32
    %c0_i32_1 = arith.constant 0 : i32
    return %c0_i32, %c0_i32_0 : i32, i32
  }
  func.func @transform_8(%arg0: i32) -> (i32, i32, i32) {
    %c0_i32 = arith.constant 0 : i32
    %c0_i32_0 = arith.constant 0 : i32
    %c0_i32_1 = arith.constant 0 : i32
    return %arg0, %c0_i32, %c0_i32_0 : i32, i32, i32
  }
}

</mosaic_0001>

<llo_original>
// kernel: sub.8
$region0: #{sub.8}
  %s0 = inlined_call_operand.vmem [shape: s32[2,16], index: 0, kind: input, shape index: {}]
  %s1 = inlined_call_operand.vmem [shape: s32[4,8], index: 1, kind: output, shape index: {}]
  $region1: #{sub.8} parent=0
    #allocation0 [shape = 'u8[4096]{0}', space=vmem, size = 0x1000, scoped, tag = 'scoped mem for output reshape']
    #allocation1 [shape = 'u8[4096]{0}', space=vmem, size = 0x1000, scoped, tag = 'scoped mem for input reshape']
    %s3 = ssub.s32 4, 1
    %v4 = vld [vmem:[%s0] sm:%s3]
    %5 = vst [vmem:[#allocation1] sm:%s3] %v4
    %v6 = vld [vmem:[#allocation1] sm:$0x3]
    %vm7 = vcmask 64512
    %8 = vst.msk [vmem:[#allocation0] ss:$2 sm:$0x3] %vm7, %v6
    %v9 = vld [vmem:[#allocation1] sm:$0x3]
    %10 = vrot.lane.b32.xlu0 %v9, 120
    %v11 = vpop.permute.xlu0 %10
    %vm12 = vcmask 64512
    %s13 = scalar_lea.vmem [#allocation0], 1
    %14 = vst.msk [vmem:[%s13] ss:$2 sm:$0x3] %vm12, %v11
    %s16 = ssub.s32 16, 1
    %v17 = vld [vmem:[#allocation0] sm:%s16]
    %s19 = ssub.s32 16, 1
    %20 = vst [vmem:[%s1] sm:%s19] %v17

// kernel: t5_block.3
$region0: #{t5_block.3}
  #allocation0 [shape = 'u32[]', space=smem, size = 0x4, offset = 0x4, fixed_abs, tag = 'smem constant byte address 0x4 - core index']
  #allocation1 [shape = 'u32[72,128]{1,0:T(1,128)}', space=vmem, size = 0x9000, scoped, tag = 'internal scratch']
  #allocation2 [shape = 'f32[32,32]{1,0:T(8,128)}', space=vmem, size = 0x4000, scoped, tag = 'scratch operand']
  #allocation3 [shape = 'f32[32,32]{1,0:T(8,128)}', space=vmem, size = 0x4000, scoped, tag = 'scratch operand']
  %s0 = inlined_call_operand.vmem [shape: f32[32,32], index: 0, kind: input, shape index: {}]
  %s1 = inlined_call_operand.vmem [shape: f32[1,32], index: 1, kind: input, shape index: {}]
  %s2 = inlined_call_operand.vmem [shape: f32[32,64], index: 2, kind: input, shape index: {}]
  %s3 = inlined_call_operand.vmem [shape: f32[64,32], index: 3, kind: input, shape index: {}]
  %s4 = inlined_call_operand.hbm [shape: f32[32,32], index: 4, kind: output, shape index: {}]
  %s5 = sld [smem:[#allocation0]]
  $region34: #{t5_block.3} parent=0
    _
  %s7 = ssub.s32 1, %s5
  %s8 = scalar_select 0, %s7, %s5
  $region1: #{t5_block.3} parent=0
    #allocation4 [shape = 'u8[16384]{0}', space=vmem, size = 0x4000, scoped, tag = 'output window, operand 0, single buffered']
    #allocation5 [shape = 's32[1]{0}', space=sflag, size = 0x4, scoped, tag = 'scoped memory for t5_block.3']
    %9 = vsyncpa [#allocation5], 0
    // Predicated region
    $region2: #{t5_block.3} parent=1 // pred_check
      _
    $region3: #{t5_block.3} parent=1 // pred_check_branch
      %11 = sbr.rel (0) target = $region5
    $region4: #{t5_block.3} parent=1 // pred_region
      _
    $region5: #{t5_block.3} parent=1 // pred_fallthru
      _
    // Predicated region
    $region6: #{t5_block.3} parent=1 // pred_check
      _
    $region7: #{t5_block.3} parent=1 // pred_check_branch
      %13 = sbr.rel (0) target = $region9
    $region8: #{t5_block.3} parent=1 // pred_region
      _
    $region9: #{t5_block.3} parent=1 // pred_fallthru
      _
    // Predicated region
    $region10: #{t5_block.3} parent=1 // pred_check
      _
    $region11: #{t5_block.3} parent=1 // pred_check_branch
      %15 = sbr.rel (0) target = $region13
    $region12: #{t5_block.3} parent=1 // pred_region
      _
    $region13: #{t5_block.3} parent=1 // pred_fallthru
      _
    // Predicated region
    $region14: #{t5_block.3} parent=1 // pred_check
      _
    $region15: #{t5_block.3} parent=1 // pred_check_branch
      %17 = sbr.rel (0) target = $region17
    $region16: #{t5_block.3} parent=1 // pred_region
      _
    $region17: #{t5_block.3} parent=1 // pred_fallthru
      _
    %p18 = scmp.eq.s32.totalorder 0, 0
    // Predicated region
    $region18: #{t5_block.3} parent=1 // pred_check
      %p19 = pneg %p18
    $region19: #{t5_block.3} parent=1 // pred_check_branch
      %21 = sbr.rel (%p19) target = $region21
    $region20: #{t5_block.3} parent=1 // pred_region
      %v22 = vld [vmem:[%s0] sm:$0xff]
      %v23 = vld [vmem:[%s0 + $0x8] sm:$0xff]
      %v24 = vld [vmem:[%s0 + $0x10] sm:$0xff]
      %v25 = vld [vmem:[%s0 + $0x18] sm:$0xff]
      %v26 = vmul.f32 %v22, %v22
      %v27 = vmul.f32 %v23, %v23
      %v28 = vmul.f32 %v24, %v24
      %v29 = vmul.f32 %v25, %v25
      %vm30 = vcmask 261120
      %v31 = vsel %vm30, %v26, 0.0
      %32 = vadd.xlane.f32.xlu0 %v31
      %v33 = vpop.xlane.xlu0 %32
      %v34 = vsel %vm30, %v27, 0.0
      %35 = vadd.xlane.f32.xlu0 %v34
      %v36 = vpop.xlane.xlu0 %35
      %v37 = vsel %vm30, %v28, 0.0
      %38 = vadd.xlane.f32.xlu0 %v37
      %v39 = vpop.xlane.xlu0 %38
      %v40 = vsel %vm30, %v29, 0.0
      %41 = vadd.xlane.f32.xlu0 %v40
      %v42 = vpop.xlane.xlu0 %41
      %v43 = vrcp.pop 32.0
      %v44 = vmul.f32 32.0, %v43
      %v45 = vsub.f32 1.0, %v44
      %v46 = vmul.f32 %v43, %v45
      %v47 = vadd.f32 %v43, %v46
      %vm48 = vweird.f32 %v43
      %v49 = vsel %vm48, %v43, %v47
      %v50 = vmul.f32 %v33, %v49
      %v51 = vmul.f32 %v36, %v49
      %v52 = vmul.f32 %v39, %v49
      %v53 = vmul.f32 %v42, %v49
      %v54 = vld [vmem:[%s1] sm:$0x1]
      %v55 = vadd.f32 %v50, 1e-06
      %v56 = vadd.f32 %v51, 1e-06
      %v57 = vadd.f32 %v52, 1e-06
      %v58 = vadd.f32 %v53, 1e-06
      %v59 = vrsqrt.pop %v55
      %v60 = vmul.f32 %v59, %v55
      %v61 = vmul.f32 %v60, %v59
      %v62 = vmul.f32 0.5, %v61
      %v63 = vsub.f32 1.5, %v62
      %v64 = vmul.f32 %v59, %v63
      %vm65 = vweird.f32 %v55
      %vm66 = vweird.f32 %v59
      %vm67 = vmor %vm65, %vm66
      %v68 = vsel %vm67, %v59, %v64
      %v69 = vrsqrt.pop %v56
      %v70 = vmul.f32 %v69, %v56
      %v71 = vmul.f32 %v70, %v69
      %v72 = vmul.f32 0.5, %v71
      %v73 = vsub.f32 1.5, %v72
      %v74 = vmul.f32 %v69, %v73
      %vm75 = vweird.f32 %v56
      %vm76 = vweird.f32 %v69
      %vm77 = vmor %vm75, %vm76
      %v78 = vsel %vm77, %v69, %v74
      %v79 = vrsqrt.pop %v57
      %v80 = vmul.f32 %v79, %v57
      %v81 = vmul.f32 %v80, %v79
      %v82 = vmul.f32 0.5, %v81
      %v83 = vsub.f32 1.5, %v82
      %v84 = vmul.f32 %v79, %v83
      %vm85 = vweird.f32 %v57
      %vm86 = vweird.f32 %v79
      %vm87 = vmor %vm85, %vm86
      %v88 = vsel %vm87, %v79, %v84
      %v89 = vrsqrt.pop %v58
      %v90 = vmul.f32 %v89, %v58
      %v91 = vmul.f32 %v90, %v89
      %v92 = vmul.f32 0.5, %v91
      %v93 = vsub.f32 1.5, %v92
      %v94 = vmul.f32 %v89, %v93
      %vm95 = vweird.f32 %v58
      %vm96 = vweird.f32 %v89
      %vm97 = vmor %vm95, %vm96
      %v98 = vsel %vm97, %v89, %v94
      %v99 = vmul.f32 %v22, %v68
      %v100 = vmul.f32 %v23, %v78
      %v101 = vmul.f32 %v24, %v88
      %v102 = vmul.f32 %v25, %v98
      %v104 = vperm.slane %v54, 0
      %v106 = vmul.f32 %v104, %v99
      %v107 = vmul.f32 %v104, %v100
      %v108 = vmul.f32 %v104, %v101
      %v109 = vmul.f32 %v104, %v102
      %110 = vst.msk [vmem:[#allocation2] sm:$0xff] %vm30, %v106
      %111 = vst.msk [vmem:[#allocation2 + $0x8] sm:$0xff] %vm30, %v107
      %112 = vst.msk [vmem:[#allocation2 + $0x10] sm:$0xff] %vm30, %v108
      %113 = vst.msk [vmem:[#allocation2 + $0x18] sm:$0xff] %vm30, %v109
      %114 = vst.msk [vmem:[#allocation3] sm:$0xff] %vm30, 0.0
      %115 = vst.msk [vmem:[#allocation3 + $0x8] sm:$0xff] %vm30, 0.0
      %116 = vst.msk [vmem:[#allocation3 + $0x10] sm:$0xff] %vm30, 0.0
      %117 = vst.msk [vmem:[#allocation3 + $0x18] sm:$0xff] %vm30, 0.0
    $region21: #{t5_block.3} parent=1 // pred_fallthru
      _
    %v118 = vld [vmem:[#allocation2] sm:$0xff]
    %v119 = vld [vmem:[#allocation2 + $0x8] sm:$0xff]
    %v120 = vld [vmem:[#allocation2 + $0x10] sm:$0xff]
    %v121 = vld [vmem:[#allocation2 + $0x18] sm:$0xff]
    %v122 = vld [vmem:[%s2] sm:$0xff]
    %v123 = vld [vmem:[%s2 + $0x8] sm:$0xff]
    %v124 = vld [vmem:[%s2 + $0x10] sm:$0xff]
    %v125 = vld [vmem:[%s2 + $0x18] sm:$0xff]
    %vm126 = vcmask 261120
    %v128 = vsel %vm126, %v118, 0
    %v131 = vsel %vm126, %v119, 0
    %v134 = vsel %vm126, %v120, 0
    %v137 = vsel %vm126, %v121, 0
    %139 = vmatpush.msra.mxu0 0.0
    %140 = vmatpush.msra.mxu0 0.0
    %141 = vmatpush.msra.mxu0 0.0
    %142 = vmatpush.msra.mxu0 0.0
    %143 = vmatpush.msra.mxu0 0.0
    %144 = vmatpush.msra.mxu0 0.0
    %145 = vmatpush.msra.mxu0 0.0
    %146 = vmatpush.msra.mxu0 0.0
    %147 = vmatpush.msra.mxu0 0.0
    %148 = vmatpush.msra.mxu0 0.0
    %149 = vmatpush.msra.mxu0 0.0
    %150 = vmatpush.msra.mxu0 0.0
    %151 = vmatpush.msra.mxu0 %v125
    %152 = vmatpush.msra.mxu0 %v124
    %153 = vmatpush.msra.mxu0 %v123
    %154 = vmatpush.msra.mxu0 %v122
    %155 = vmatmul.f32.gmra.mxu0 %v128
    %v156 = vpop.f32.mrf.mxu0
    %v157 = vadd.f32 0.0, %v156
    %158 = vmatmul.f32.gmra.mxu0 %v131
    %v159 = vpop.f32.mrf.mxu0
    %v160 = vadd.f32 0.0, %v159
    %161 = vmatmul.f32.gmra.mxu0 %v134
    %v162 = vpop.f32.mrf.mxu0
    %v163 = vadd.f32 0.0, %v162
    %164 = vmatmul.f32.gmra.mxu0 %v137
    %v165 = vpop.f32.mrf.mxu0
    %v166 = vadd.f32 0.0, %v165
    %167 = vdwg.mxu0
    %v168 = vmax.f32 %v157, 0.0
    %v169 = vmax.f32 %v160, 0.0
    %v170 = vmax.f32 %v163, 0.0
    %v171 = vmax.f32 %v166, 0.0
    %v172 = vld [vmem:[#allocation3] sm:$0xff]
    %v173 = vld [vmem:[#allocation3 + $0x8] sm:$0xff]
    %v174 = vld [vmem:[#allocation3 + $0x10] sm:$0xff]
    %v175 = vld [vmem:[#allocation3 + $0x18] sm:$0xff]
    %v176 = vld [vmem:[%s3] sm:$0xff]
    %v177 = vld [vmem:[%s3 + $0x8] sm:$0xff]
    %v178 = vld [vmem:[%s3 + $0x10] sm:$0xff]
    %v179 = vld [vmem:[%s3 + $0x18] sm:$0xff]
    %v180 = vld [vmem:[%s3 + $0x20] sm:$0xff]
    %v181 = vld [vmem:[%s3 + $0x28] sm:$0xff]
    %v182 = vld [vmem:[%s3 + $0x30] sm:$0xff]
    %v183 = vld [vmem:[%s3 + $0x38] sm:$0xff]
    %vm184 = vcmask 523264
    %v186 = vsel %vm184, %v168, 0
    %v189 = vsel %vm184, %v169, 0
    %v192 = vsel %vm184, %v170, 0
    %v195 = vsel %vm184, %v171, 0
    %197 = vmatpush.msra.mxu0 0.0
    %198 = vmatpush.msra.mxu0 0.0
    %199 = vmatpush.msra.mxu0 0.0
    %200 = vmatpush.msra.mxu0 0.0
    %201 = vmatpush.msra.mxu0 0.0
    %202 = vmatpush.msra.mxu0 0.0
    %203 = vmatpush.msra.mxu0 0.0
    %204 = vmatpush.msra.mxu0 0.0
    %205 = vmatpush.msra.mxu0 %v183
    %206 = vmatpush.msra.mxu0 %v182
    %207 = vmatpush.msra.mxu0 %v181
    %208 = vmatpush.msra.mxu0 %v180
    %209 = vmatpush.msra.mxu0 %v179
    %210 = vmatpush.msra.mxu0 %v178
    %211 = vmatpush.msra.mxu0 %v177
    %212 = vmatpush.msra.mxu0 %v176
    %213 = vmatmul.f32.gmra.mxu0 %v186
    %v214 = vpop.f32.mrf.mxu0
    %v215 = vadd.f32 0.0, %v214
    %216 = vmatmul.f32.gmra.mxu0 %v189
    %v217 = vpop.f32.mrf.mxu0
    %v218 = vadd.f32 0.0, %v217
    %219 = vmatmul.f32.gmra.mxu0 %v192
    %v220 = vpop.f32.mrf.mxu0
    %v221 = vadd.f32 0.0, %v220
    %222 = vmatmul.f32.gmra.mxu0 %v195
    %v223 = vpop.f32.mrf.mxu0
    %v224 = vadd.f32 0.0, %v223
    %225 = vdwg.mxu0
    %v226 = vadd.f32 %v172, %v215
    %v227 = vadd.f32 %v173, %v218
    %v228 = vadd.f32 %v174, %v221
    %v229 = vadd.f32 %v175, %v224
    %230 = vst.msk [vmem:[#allocation3] sm:$0xff] %vm126, %v226
    %231 = vst.msk [vmem:[#allocation3 + $0x8] sm:$0xff] %vm126, %v227
    %232 = vst.msk [vmem:[#allocation3 + $0x10] sm:$0xff] %vm126, %v228
    %233 = vst.msk [vmem:[#allocation3 + $0x18] sm:$0xff] %vm126, %v229
    // Predicated region
    $region22: #{t5_block.3} parent=1 // pred_check
      %p234 = pneg %p18
    $region23: #{t5_block.3} parent=1 // pred_check_branch
      %236 = sbr.rel (%p234) target = $region25
    $region24: #{t5_block.3} parent=1 // pred_region
      %v237 = vld [vmem:[#allocation3] sm:$0xff]
      %v238 = vld [vmem:[#allocation3 + $0x8] sm:$0xff]
      %v239 = vld [vmem:[#allocation3 + $0x10] sm:$0xff]
      %v240 = vld [vmem:[#allocation3 + $0x18] sm:$0xff]
      %v241 = vld [vmem:[%s0] sm:$0xff]
      %v242 = vld [vmem:[%s0 + $0x8] sm:$0xff]
      %v243 = vld [vmem:[%s0 + $0x10] sm:$0xff]
      %v244 = vld [vmem:[%s0 + $0x18] sm:$0xff]
      %v245 = vadd.f32 %v237, %v241
      %v246 = vadd.f32 %v238, %v242
      %v247 = vadd.f32 %v239, %v243
      %v248 = vadd.f32 %v240, %v244
      %249 = vst.msk [vmem:[#allocation4] sm:$0xff] %vm126, %v245
      %250 = vst.msk [vmem:[#allocation4 + $0x8] sm:$0xff] %vm126, %v246
      %251 = vst.msk [vmem:[#allocation4 + $0x10] sm:$0xff] %vm126, %v247
      %252 = vst.msk [vmem:[#allocation4 + $0x18] sm:$0xff] %vm126, %v248
    $region25: #{t5_block.3} parent=1 // pred_fallthru
      _
    // Predicated region
    $region26: #{t5_block.3} parent=1 // pred_check
      _
    $region27: #{t5_block.3} parent=1 // pred_check_branch
      %254 = sbr.rel (0) target = $region29
    $region28: #{t5_block.3} parent=1 // pred_region
      %256 = vsyncadd [#allocation5], 0
      %s257 = sshll.u32 [#allocation4], 4
      %s258 = int_to_ptr.vmem [resolvable:$true] %s257
      %s259 = sshll.u32 %s4, 4
      %s260 = int_to_ptr.hbm [resolvable:$true] %s259
      %265 = dma.vmem_to_hbm [thread:$0]  %s258, 512, %s260, [#allocation5], 128, 128, 8
    $region29: #{t5_block.3} parent=1 // pred_fallthru
      _
    // Predicated region
    $region30: #{t5_block.3} parent=1 // pred_check
      _
    $region31: #{t5_block.3} parent=1 // pred_check_branch
      %267 = sbr.rel (0) target = $region33
    $region32: #{t5_block.3} parent=1 // pred_region
      %269 = dma.done [#allocation5], 512
    $region33: #{t5_block.3} parent=1 // pred_fallthru
      _
    %270 = vsyncpa [#allocation5], 1

// kernel: t5_block.2
$region0: #{t5_block.2}
  #allocation0 [shape = 'u32[]', space=smem, size = 0x4, offset = 0x4, fixed_abs, tag = 'smem constant byte address 0x4 - core index']
  #allocation1 [shape = 'u32[72,128]{1,0:T(1,128)}', space=vmem, size = 0x9000, scoped, tag = 'internal scratch']
  %s0 = inlined_call_operand.vmem [shape: f32[4,8,32], index: 0, kind: input, shape index: {}]
  %s1 = inlined_call_operand.vmem [shape: f32[4,4,8,8], index: 1, kind: input, shape index: {}]
  %s2 = inlined_call_operand.vmem [shape: f32[4,1,8], index: 2, kind: input, shape index: {}]
  %s3 = inlined_call_operand.vmem [shape: f32[1,32], index: 3, kind: input, shape index: {}]
  %s4 = inlined_call_operand.vmem [shape: f32[32,32], index: 4, kind: input, shape index: {}]
  %s5 = inlined_call_operand.vmem [shape: f32[32,32], index: 5, kind: input, shape index: {}]
  %s6 = inlined_call_operand.vmem [shape: f32[32,32], index: 6, kind: input, shape index: {}]
  %s7 = inlined_call_operand.vmem [shape: f32[32,32], index: 7, kind: input, shape index: {}]
  %s8 = inlined_call_operand.vmem [shape: f32[4,8,32], index: 8, kind: output, shape index: {}]
  %s9 = sld [smem:[#allocation0]]
  $region42: #{t5_block.2} parent=0
    _
  %s11 = ssub.s32 1, %s9
  %s12 = scalar_select 0, %s11, %s9
  // Predicated region
  $region2: #{t5_block.2} parent=0 // pred_check
    _
  $region3: #{t5_block.2} parent=0 // pred_check_branch
    %14 = sbr.rel (0) target = $region5
  $region4: #{t5_block.2} parent=0 // pred_region
    _
  $region5: #{t5_block.2} parent=0 // pred_fallthru
    _
  // Predicated region
  $region6: #{t5_block.2} parent=0 // pred_check
    _
  $region7: #{t5_block.2} parent=0 // pred_check_branch
    %16 = sbr.rel (0) target = $region9
  $region8: #{t5_block.2} parent=0 // pred_region
    _
  $region9: #{t5_block.2} parent=0 // pred_fallthru
    _
  // Predicated region
  $region10: #{t5_block.2} parent=0 // pred_check
    _
  $region11: #{t5_block.2} parent=0 // pred_check_branch
    %18 = sbr.rel (0) target = $region13
  $region12: #{t5_block.2} parent=0 // pred_region
    _
  $region13: #{t5_block.2} parent=0 // pred_fallthru
    _
  // Predicated region
  $region14: #{t5_block.2} parent=0 // pred_check
    _
  $region15: #{t5_block.2} parent=0 // pred_check_branch
    %20 = sbr.rel (0) target = $region17
  $region16: #{t5_block.2} parent=0 // pred_region
    _
  $region17: #{t5_block.2} parent=0 // pred_fallthru
    _
  // Predicated region
  $region18: #{t5_block.2} parent=0 // pred_check
    _
  $region19: #{t5_block.2} parent=0 // pred_check_branch
    %22 = sbr.rel (0) target = $region21
  $region20: #{t5_block.2} parent=0 // pred_region
    _
  $region21: #{t5_block.2} parent=0 // pred_fallthru
    _
  // Predicated region
  $region22: #{t5_block.2} parent=0 // pred_check
    _
  $region23: #{t5_block.2} parent=0 // pred_check_branch
    %24 = sbr.rel (0) target = $region25
  $region24: #{t5_block.2} parent=0 // pred_region
    _
  $region25: #{t5_block.2} parent=0 // pred_fallthru
    _
  // Predicated region
  $region26: #{t5_block.2} parent=0 // pred_check
    _
  $region27: #{t5_block.2} parent=0 // pred_check_branch
    %26 = sbr.rel (0) target = $region29
  $region28: #{t5_block.2} parent=0 // pred_region
    _
  $region29: #{t5_block.2} parent=0 // pred_fallthru
    _
  // Predicated region
  $region30: #{t5_block.2} parent=0 // pred_check
    _
  $region31: #{t5_block.2} parent=0 // pred_check_branch
    %28 = sbr.rel (0) target = $region33
  $region32: #{t5_block.2} parent=0 // pred_region
    _
  $region33: #{t5_block.2} parent=0 // pred_fallthru
    _
  %v29 = vld [vmem:[%s0] sm:$0xff]
  %v30 = vld [vmem:[%s0 + $0x8] sm:$0xff]
  %v31 = vld [vmem:[%s0 + $0x10] sm:$0xff]
  %v32 = vld [vmem:[%s0 + $0x18] sm:$0xff]
  %v33 = vmul.f32 %v29, %v29
  %v34 = vmul.f32 %v30, %v30
  %v35 = vmul.f32 %v31, %v31
  %v36 = vmul.f32 %v32, %v32
  %vm37 = vcmask 261120
  %v38 = vsel %vm37, %v33, 0.0
  %39 = vadd.xlane.f32.xlu0 %v38
  %v40 = vpop.xlane.xlu0 %39
  %v41 = vsel %vm37, %v34, 0.0
  %42 = vadd.xlane.f32.xlu0 %v41
  %v43 = vpop.xlane.xlu0 %42
  %v44 = vsel %vm37, %v35, 0.0
  %45 = vadd.xlane.f32.xlu0 %v44
  %v46 = vpop.xlane.xlu0 %45
  %v47 = vsel %vm37, %v36, 0.0
  %48 = vadd.xlane.f32.xlu0 %v47
  %v49 = vpop.xlane.xlu0 %48
  %v50 = vrcp.pop 32.0
  %v51 = vmul.f32 32.0, %v50
  %v52 = vsub.f32 1.0, %v51
  %v53 = vmul.f32 %v50, %v52
  %v54 = vadd.f32 %v50, %v53
  %vm55 = vweird.f32 %v50
  %v56 = vsel %vm55, %v50, %v54
  %v57 = vmul.f32 %v40, %v56
  %v58 = vmul.f32 %v43, %v56
  %v59 = vmul.f32 %v46, %v56
  %v60 = vmul.f32 %v49, %v56
  %v61 = vld [vmem:[%s3] sm:$0x1]
  %v62 = vadd.f32 %v57, 1e-06
  %v63 = vadd.f32 %v58, 1e-06
  %v64 = vadd.f32 %v59, 1e-06
  %v65 = vadd.f32 %v60, 1e-06
  %v66 = vrsqrt.pop %v62
  %v67 = vmul.f32 %v66, %v62
  %v68 = vmul.f32 %v67, %v66
  %v69 = vmul.f32 0.5, %v68
  %v70 = vsub.f32 1.5, %v69
  %v71 = vmul.f32 %v66, %v70
  %vm72 = vweird.f32 %v62
  %vm73 = vweird.f32 %v66
  %vm74 = vmor %vm72, %vm73
  %v75 = vsel %vm74, %v66, %v71
  %v76 = vrsqrt.pop %v63
  %v77 = vmul.f32 %v76, %v63
  %v78 = vmul.f32 %v77, %v76
  %v79 = vmul.f32 0.5, %v78
  %v80 = vsub.f32 1.5, %v79
  %v81 = vmul.f32 %v76, %v80
  %vm82 = vweird.f32 %v63
  %vm83 = vweird.f32 %v76
  %vm84 = vmor %vm82, %vm83
  %v85 = vsel %vm84, %v76, %v81
  %v86 = vrsqrt.pop %v64
  %v87 = vmul.f32 %v86, %v64
  %v88 = vmul.f32 %v87, %v86
  %v89 = vmul.f32 0.5, %v88
  %v90 = vsub.f32 1.5, %v89
  %v91 = vmul.f32 %v86, %v90
  %vm92 = vweird.f32 %v64
  %vm93 = vweird.f32 %v86
  %vm94 = vmor %vm92, %vm93
  %v95 = vsel %vm94, %v86, %v91
  %v96 = vrsqrt.pop %v65
  %v97 = vmul.f32 %v96, %v65
  %v98 = vmul.f32 %v97, %v96
  %v99 = vmul.f32 0.5, %v98
  %v100 = vsub.f32 1.5, %v99
  %v101 = vmul.f32 %v96, %v100
  %vm102 = vweird.f32 %v65
  %vm103 = vweird.f32 %v96
  %vm104 = vmor %vm102, %vm103
  %v105 = vsel %vm104, %v96, %v101
  %v106 = vmul.f32 %v29, %v75
  %v107 = vmul.f32 %v30, %v85
  %v108 = vmul.f32 %v31, %v95
  %v109 = vmul.f32 %v32, %v105
  %v111 = vperm.slane %v61, 0
  %v113 = vmul.f32 %v111, %v106
  %v114 = vmul.f32 %v111, %v107
  %v115 = vmul.f32 %v111, %v108
  %v116 = vmul.f32 %v111, %v109
  %v117 = vld [vmem:[%s4] sm:$0xff]
  %v118 = vld [vmem:[%s4 + $0x8] sm:$0xff]
  %v119 = vld [vmem:[%s4 + $0x10] sm:$0xff]
  %v120 = vld [vmem:[%s4 + $0x18] sm:$0xff]
  %v122 = vsel %vm37, %v113, 0
  %v125 = vsel %vm37, %v114, 0
  %v128 = vsel %vm37, %v115, 0
  %v131 = vsel %vm37, %v116, 0
  %133 = vmatpush.msra.mxu0 0.0
  %134 = vmatpush.msra.mxu0 0.0
  %135 = vmatpush.msra.mxu0 0.0
  %136 = vmatpush.msra.mxu0 0.0
  %137 = vmatpush.msra.mxu0 0.0
  %138 = vmatpush.msra.mxu0 0.0
  %139 = vmatpush.msra.mxu0 0.0
  %140 = vmatpush.msra.mxu0 0.0
  %141 = vmatpush.msra.mxu0 0.0
  %142 = vmatpush.msra.mxu0 0.0
  %143 = vmatpush.msra.mxu0 0.0
  %144 = vmatpush.msra.mxu0 0.0
  %145 = vmatpush.msra.mxu0 %v120
  %146 = vmatpush.msra.mxu0 %v119
  %147 = vmatpush.msra.mxu0 %v118
  %148 = vmatpush.msra.mxu0 %v117
  %149 = vmatmul.f32.gmra.mxu0 %v122
  %v150 = vpop.f32.mrf.mxu0
  %v151 = vadd.f32 0.0, %v150
  %152 = vmatmul.f32.gmra.mxu0 %v125
  %v153 = vpop.f32.mrf.mxu0
  %v154 = vadd.f32 0.0, %v153
  %155 = vmatmul.f32.gmra.mxu0 %v128
  %v156 = vpop.f32.mrf.mxu0
  %v157 = vadd.f32 0.0, %v156
  %158 = vmatmul.f32.gmra.mxu0 %v131
  %v159 = vpop.f32.mrf.mxu0
  %v160 = vadd.f32 0.0, %v159
  %161 = vdwg.mxu0
  %v162 = vld [vmem:[%s5] sm:$0xff]
  %v163 = vld [vmem:[%s5 + $0x8] sm:$0xff]
  %v164 = vld [vmem:[%s5 + $0x10] sm:$0xff]
  %v165 = vld [vmem:[%s5 + $0x18] sm:$0xff]
  %166 = vmatpush.msra.mxu0 0.0
  %167 = vmatpush.msra.mxu0 0.0
  %168 = vmatpush.msra.mxu0 0.0
  %169 = vmatpush.msra.mxu0 0.0
  %170 = vmatpush.msra.mxu0 0.0
  %171 = vmatpush.msra.mxu0 0.0
  %172 = vmatpush.msra.mxu0 0.0
  %173 = vmatpush.msra.mxu0 0.0
  %174 = vmatpush.msra.mxu0 0.0
  %175 = vmatpush.msra.mxu0 0.0
  %176 = vmatpush.msra.mxu0 0.0
  %177 = vmatpush.msra.mxu0 0.0
  %178 = vmatpush.msra.mxu0 %v165
  %179 = vmatpush.msra.mxu0 %v164
  %180 = vmatpush.msra.mxu0 %v163
  %181 = vmatpush.msra.mxu0 %v162
  %182 = vmatmul.f32.gmra.mxu0 %v122
  %v183 = vpop.f32.mrf.mxu0
  %v184 = vadd.f32 0.0, %v183
  %185 = vmatmul.f32.gmra.mxu0 %v125
  %v186 = vpop.f32.mrf.mxu0
  %v187 = vadd.f32 0.0, %v186
  %188 = vmatmul.f32.gmra.mxu0 %v128
  %v189 = vpop.f32.mrf.mxu0
  %v190 = vadd.f32 0.0, %v189
  %191 = vmatmul.f32.gmra.mxu0 %v131
  %v192 = vpop.f32.mrf.mxu0
  %v193 = vadd.f32 0.0, %v192
  %194 = vdwg.mxu0
  %v195 = vld [vmem:[%s6] sm:$0xff]
  %v196 = vld [vmem:[%s6 + $0x8] sm:$0xff]
  %v197 = vld [vmem:[%s6 + $0x10] sm:$0xff]
  %v198 = vld [vmem:[%s6 + $0x18] sm:$0xff]
  %199 = vmatpush.msra.mxu0 0.0
  %200 = vmatpush.msra.mxu0 0.0
  %201 = vmatpush.msra.mxu0 0.0
  %202 = vmatpush.msra.mxu0 0.0
  %203 = vmatpush.msra.mxu0 0.0
  %204 = vmatpush.msra.mxu0 0.0
  %205 = vmatpush.msra.mxu0 0.0
  %206 = vmatpush.msra.mxu0 0.0
  %207 = vmatpush.msra.mxu0 0.0
  %208 = vmatpush.msra.mxu0 0.0
  %209 = vmatpush.msra.mxu0 0.0
  %210 = vmatpush.msra.mxu0 0.0
  %211 = vmatpush.msra.mxu0 %v198
  %212 = vmatpush.msra.mxu0 %v197
  %213 = vmatpush.msra.mxu0 %v196
  %214 = vmatpush.msra.mxu0 %v195
  %215 = vmatmul.f32.gmra.mxu0 %v122
  %v216 = vpop.f32.mrf.mxu0
  %v217 = vadd.f32 0.0, %v216
  %218 = vmatmul.f32.gmra.mxu0 %v125
  %v219 = vpop.f32.mrf.mxu0
  %v220 = vadd.f32 0.0, %v219
  %221 = vmatmul.f32.gmra.mxu0 %v128
  %v222 = vpop.f32.mrf.mxu0
  %v223 = vadd.f32 0.0, %v222
  %224 = vmatmul.f32.gmra.mxu0 %v131
  %v225 = vpop.f32.mrf.mxu0
  %v226 = vadd.f32 0.0, %v225
  %227 = vdwg.mxu0
  %v228 = vld [vmem:[%s2] sm:$0x1]
  %v229 = vld [vmem:[%s2 + $0x1] sm:$0x1]
  %v230 = vld [vmem:[%s2 + $0x2] sm:$0x1]
  %v231 = vld [vmem:[%s2 + $0x3] sm:$0x1]
  %v232 = vsub.f32 1.0, %v228
  %v233 = vsub.f32 1.0, %v229
  %v234 = vsub.f32 1.0, %v230
  %v235 = vsub.f32 1.0, %v231
  %v236 = vmul.f32 %v232, -1000.0
  %v237 = vmul.f32 %v233, -1000.0
  %v238 = vmul.f32 %v234, -1000.0
  %v239 = vmul.f32 %v235, -1000.0
  %v240 = vld [vmem:[%s1] sm:$0xff]
  %v241 = vld [vmem:[%s1 + $0x20] sm:$0xff]
  %v242 = vld [vmem:[%s1 + $0x40] sm:$0xff]
  %v243 = vld [vmem:[%s1 + $0x60] sm:$0xff]
  %vm244 = vcmask 64512
  %v246 = vsel %vm244, %v151, 0
  %v249 = vsel %vm244, %v184, 0
  %251 = vmatpush.xpose.msra.mxu0 0.0
  %252 = vmatpush.xpose.msra.mxu0 0.0
  %253 = vmatpush.xpose.msra.mxu0 0.0
  %254 = vmatpush.xpose.msra.mxu0 0.0
  %255 = vmatpush.xpose.msra.mxu0 0.0
  %256 = vmatpush.xpose.msra.mxu0 0.0
  %257 = vmatpush.xpose.msra.mxu0 0.0
  %258 = vmatpush.xpose.msra.mxu0 0.0
  %259 = vmatpush.xpose.msra.mxu0 0.0
  %260 = vmatpush.xpose.msra.mxu0 0.0
  %261 = vmatpush.xpose.msra.mxu0 0.0
  %262 = vmatpush.xpose.msra.mxu0 0.0
  %263 = vmatpush.xpose.msra.mxu0 0.0
  %264 = vmatpush.xpose.msra.mxu0 0.0
  %265 = vmatpush.xpose.msra.mxu0 0.0
  %266 = vmatpush.xpose.msra.mxu0 %v249
  %267 = vmatmul.f32.gmra.mxu0 %v246
  %v268 = vpop.f32.mrf.mxu0
  %v269 = vadd.f32 %v240, %v268
  %270 = vdwg.mxu0
  %v272 = vsel %vm244, %v154, 0
  %v275 = vsel %vm244, %v187, 0
  %277 = vmatpush.xpose.msra.mxu0 0.0
  %278 = vmatpush.xpose.msra.mxu0 0.0
  %279 = vmatpush.xpose.msra.mxu0 0.0
  %280 = vmatpush.xpose.msra.mxu0 0.0
  %281 = vmatpush.xpose.msra.mxu0 0.0
  %282 = vmatpush.xpose.msra.mxu0 0.0
  %283 = vmatpush.xpose.msra.mxu0 0.0
  %284 = vmatpush.xpose.msra.mxu0 0.0
  %285 = vmatpush.xpose.msra.mxu0 0.0
  %286 = vmatpush.xpose.msra.mxu0 0.0
  %287 = vmatpush.xpose.msra.mxu0 0.0
  %288 = vmatpush.xpose.msra.mxu0 0.0
  %289 = vmatpush.xpose.msra.mxu0 0.0
  %290 = vmatpush.xpose.msra.mxu0 0.0
  %291 = vmatpush.xpose.msra.mxu0 0.0
  %292 = vmatpush.xpose.msra.mxu0 %v275
  %293 = vmatmul.f32.gmra.mxu0 %v272
  %v294 = vpop.f32.mrf.mxu0
  %v295 = vadd.f32 %v241, %v294
  %296 = vdwg.mxu0
  %v298 = vsel %vm244, %v157, 0
  %v301 = vsel %vm244, %v190, 0
  %303 = vmatpush.xpose.msra.mxu0 0.0
  %304 = vmatpush.xpose.msra.mxu0 0.0
  %305 = vmatpush.xpose.msra.mxu0 0.0
  %306 = vmatpush.xpose.msra.mxu0 0.0
  %307 = vmatpush.xpose.msra.mxu0 0.0
  %308 = vmatpush.xpose.msra.mxu0 0.0
  %309 = vmatpush.xpose.msra.mxu0 0.0
  %310 = vmatpush.xpose.msra.mxu0 0.0
  %311 = vmatpush.xpose.msra.mxu0 0.0
  %312 = vmatpush.xpose.msra.mxu0 0.0
  %313 = vmatpush.xpose.msra.mxu0 0.0
  %314 = vmatpush.xpose.msra.mxu0 0.0
  %315 = vmatpush.xpose.msra.mxu0 0.0
  %316 = vmatpush.xpose.msra.mxu0 0.0
  %317 = vmatpush.xpose.msra.mxu0 0.0
  %318 = vmatpush.xpose.msra.mxu0 %v301
  %319 = vmatmul.f32.gmra.mxu0 %v298
  %v320 = vpop.f32.mrf.mxu0
  %v321 = vadd.f32 %v242, %v320
  %322 = vdwg.mxu0
  %v324 = vsel %vm244, %v160, 0
  %v327 = vsel %vm244, %v193, 0
  %329 = vmatpush.xpose.msra.mxu0 0.0
  %330 = vmatpush.xpose.msra.mxu0 0.0
  %331 = vmatpush.xpose.msra.mxu0 0.0
  %332 = vmatpush.xpose.msra.mxu0 0.0
  %333 = vmatpush.xpose.msra.mxu0 0.0
  %334 = vmatpush.xpose.msra.mxu0 0.0
  %335 = vmatpush.xpose.msra.mxu0 0.0
  %336 = vmatpush.xpose.msra.mxu0 0.0
  %337 = vmatpush.xpose.msra.mxu0 0.0
  %338 = vmatpush.xpose.msra.mxu0 0.0
  %339 = vmatpush.xpose.msra.mxu0 0.0
  %340 = vmatpush.xpose.msra.mxu0 0.0
  %341 = vmatpush.xpose.msra.mxu0 0.0
  %342 = vmatpush.xpose.msra.mxu0 0.0
  %343 = vmatpush.xpose.msra.mxu0 0.0
  %344 = vmatpush.xpose.msra.mxu0 %v327
  %345 = vmatmul.f32.gmra.mxu0 %v324
  %v346 = vpop.f32.mrf.mxu0
  %v347 = vadd.f32 %v243, %v346
  %348 = vdwg.mxu0
  %v353 = vperm.slane %v236, 0
  %v354 = vperm.slane %v237, 0
  %v355 = vperm.slane %v238, 0
  %v356 = vperm.slane %v239, 0
  %v361 = vadd.f32 %v269, %v353
  %v362 = vadd.f32 %v295, %v354
  %v363 = vadd.f32 %v321, %v355
  %v364 = vadd.f32 %v347, %v356
  %v365 = vsel %vm244, %v361, -inf
  %366 = vmax.xlane.f32.xlu0 %v365
  %v367 = vpop.xlane.xlu0 %366
  %v368 = vsel %vm244, %v362, -inf
  %369 = vmax.xlane.f32.xlu0 %v368
  %v370 = vpop.xlane.xlu0 %369
  %v371 = vsel %vm244, %v363, -inf
  %372 = vmax.xlane.f32.xlu0 %v371
  %v373 = vpop.xlane.xlu0 %372
  %v374 = vsel %vm244, %v364, -inf
  %375 = vmax.xlane.f32.xlu0 %v374
  %v376 = vpop.xlane.xlu0 %375
  %v377 = vsub.f32 %v361, %v367
  %v378 = vsub.f32 %v362, %v370
  %v379 = vsub.f32 %v363, %v373
  %v380 = vsub.f32 %v364, %v376
  %v381 = vmul.f32 %v377, 1.442695
  %v382 = vpow.pop %v381
  %v383 = vmul.f32 %v378, 1.442695
  %v384 = vpow.pop %v383
  %v385 = vmul.f32 %v379, 1.442695
  %v386 = vpow.pop %v385
  %v387 = vmul.f32 %v380, 1.442695
  %v388 = vpow.pop %v387
  %v389 = vsel %vm244, %v382, 0.0
  %390 = vadd.xlane.f32.xlu0 %v389
  %v391 = vpop.xlane.xlu0 %390
  %v392 = vsel %vm244, %v384, 0.0
  %393 = vadd.xlane.f32.xlu0 %v392
  %v394 = vpop.xlane.xlu0 %393
  %v395 = vsel %vm244, %v386, 0.0
  %396 = vadd.xlane.f32.xlu0 %v395
  %v397 = vpop.xlane.xlu0 %396
  %v398 = vsel %vm244, %v388, 0.0
  %399 = vadd.xlane.f32.xlu0 %v398
  %v400 = vpop.xlane.xlu0 %399
  %v401 = vrcp.pop %v391
  %v402 = vrcp.pop %v394
  %v403 = vrcp.pop %v397
  %v404 = vrcp.pop %v400
  %v405 = vmul.f32 %v382, %v401
  %v406 = vmul.f32 %v384, %v402
  %v407 = vmul.f32 %v386, %v403
  %v408 = vmul.f32 %v388, %v404
  %v410 = vsel %vm244, %v405, 0
  %412 = vmatpush.msra.mxu0 0.0
  %413 = vmatpush.msra.mxu0 0.0
  %414 = vmatpush.msra.mxu0 0.0
  %415 = vmatpush.msra.mxu0 0.0
  %416 = vmatpush.msra.mxu0 0.0
  %417 = vmatpush.msra.mxu0 0.0
  %418 = vmatpush.msra.mxu0 0.0
  %419 = vmatpush.msra.mxu0 0.0
  %420 = vmatpush.msra.mxu0 0.0
  %421 = vmatpush.msra.mxu0 0.0
  %422 = vmatpush.msra.mxu0 0.0
  %423 = vmatpush.msra.mxu0 0.0
  %424 = vmatpush.msra.mxu0 0.0
  %425 = vmatpush.msra.mxu0 0.0
  %426 = vmatpush.msra.mxu0 0.0
  %427 = vmatpush.msra.mxu0 %v217
  %428 = vmatmul.f32.gmra.mxu0 %v410
  %v429 = vpop.f32.mrf.mxu0
  %v430 = vadd.f32 0.0, %v429
  %431 = vdwg.mxu0
  %v433 = vsel %vm244, %v406, 0
  %435 = vmatpush.msra.mxu0 0.0
  %436 = vmatpush.msra.mxu0 0.0
  %437 = vmatpush.msra.mxu0 0.0
  %438 = vmatpush.msra.mxu0 0.0
  %439 = vmatpush.msra.mxu0 0.0
  %440 = vmatpush.msra.mxu0 0.0
  %441 = vmatpush.msra.mxu0 0.0
  %442 = vmatpush.msra.mxu0 0.0
  %443 = vmatpush.msra.mxu0 0.0
  %444 = vmatpush.msra.mxu0 0.0
  %445 = vmatpush.msra.mxu0 0.0
  %446 = vmatpush.msra.mxu0 0.0
  %447 = vmatpush.msra.mxu0 0.0
  %448 = vmatpush.msra.mxu0 0.0
  %449 = vmatpush.msra.mxu0 0.0
  %450 = vmatpush.msra.mxu0 %v220
  %451 = vmatmul.f32.gmra.mxu0 %v433
  %v452 = vpop.f32.mrf.mxu0
  %v453 = vadd.f32 0.0, %v452
  %454 = vdwg.mxu0
  %v456 = vsel %vm244, %v407, 0
  %458 = vmatpush.msra.mxu0 0.0
  %459 = vmatpush.msra.mxu0 0.0
  %460 = vmatpush.msra.mxu0 0.0
  %461 = vmatpush.msra.mxu0 0.0
  %462 = vmatpush.msra.mxu0 0.0
  %463 = vmatpush.msra.mxu0 0.0
  %464 = vmatpush.msra.mxu0 0.0
  %465 = vmatpush.msra.mxu0 0.0
  %466 = vmatpush.msra.mxu0 0.0
  %467 = vmatpush.msra.mxu0 0.0
  %468 = vmatpush.msra.mxu0 0.0
  %469 = vmatpush.msra.mxu0 0.0
  %470 = vmatpush.msra.mxu0 0.0
  %471 = vmatpush.msra.mxu0 0.0
  %472 = vmatpush.msra.mxu0 0.0
  %473 = vmatpush.msra.mxu0 %v223
  %474 = vmatmul.f32.gmra.mxu0 %v456
  %v475 = vpop.f32.mrf.mxu0
  %v476 = vadd.f32 0.0, %v475
  %477 = vdwg.mxu0
  %v479 = vsel %vm244, %v408, 0
  %481 = vmatpush.msra.mxu0 0.0
  %482 = vmatpush.msra.mxu0 0.0
  %483 = vmatpush.msra.mxu0 0.0
  %484 = vmatpush.msra.mxu0 0.0
  %485 = vmatpush.msra.mxu0 0.0
  %486 = vmatpush.msra.mxu0 0.0
  %487 = vmatpush.msra.mxu0 0.0
  %488 = vmatpush.msra.mxu0 0.0
  %489 = vmatpush.msra.mxu0 0.0
  %490 = vmatpush.msra.mxu0 0.0
  %491 = vmatpush.msra.mxu0 0.0
  %492 = vmatpush.msra.mxu0 0.0
  %493 = vmatpush.msra.mxu0 0.0
  %494 = vmatpush.msra.mxu0 0.0
  %495 = vmatpush.msra.mxu0 0.0
  %496 = vmatpush.msra.mxu0 %v226
  %497 = vmatmul.f32.gmra.mxu0 %v479
  %v498 = vpop.f32.mrf.mxu0
  %v499 = vadd.f32 0.0, %v498
  %500 = vdwg.mxu0
  %s501 = scalar_lea.vmem %s1, 8
  %v502 = vld [vmem:[%s501] sm:$0xff]
  %v503 = vld [vmem:[%s501 + $0x20] sm:$0xff]
  %v504 = vld [vmem:[%s501 + $0x40] sm:$0xff]
  %v505 = vld [vmem:[%s501 + $0x60] sm:$0xff]
  %506 = vrot.lane.b32.xlu0 %v151, 120
  %v507 = vpop.permute.xlu0 %506
  %508 = vrot.lane.b32.xlu0 %v184, 120
  %v509 = vpop.permute.xlu0 %508
  %v510 = vsel %vm244, %v507, 0
  %v512 = vsel %vm244, %v509, 0
  %514 = vmatpush.xpose.msra.mxu0 0.0
  %515 = vmatpush.xpose.msra.mxu0 0.0
  %516 = vmatpush.xpose.msra.mxu0 0.0
  %517 = vmatpush.xpose.msra.mxu0 0.0
  %518 = vmatpush.xpose.msra.mxu0 0.0
  %519 = vmatpush.xpose.msra.mxu0 0.0
  %520 = vmatpush.xpose.msra.mxu0 0.0
  %521 = vmatpush.xpose.msra.mxu0 0.0
  %522 = vmatpush.xpose.msra.mxu0 0.0
  %523 = vmatpush.xpose.msra.mxu0 0.0
  %524 = vmatpush.xpose.msra.mxu0 0.0
  %525 = vmatpush.xpose.msra.mxu0 0.0
  %526 = vmatpush.xpose.msra.mxu0 0.0
  %527 = vmatpush.xpose.msra.mxu0 0.0
  %528 = vmatpush.xpose.msra.mxu0 0.0
  %529 = vmatpush.xpose.msra.mxu0 %v512
  %530 = vmatmul.f32.gmra.mxu0 %v510
  %v531 = vpop.f32.mrf.mxu0
  %v532 = vadd.f32 %v502, %v531
  %533 = vdwg.mxu0
  %534 = vrot.lane.b32.xlu0 %v154, 120
  %v535 = vpop.permute.xlu0 %534
  %536 = vrot.lane.b32.xlu0 %v187, 120
  %v537 = vpop.permute.xlu0 %536
  %v538 = vsel %vm244, %v535, 0
  %v540 = vsel %vm244, %v537, 0
  %542 = vmatpush.xpose.msra.mxu0 0.0
  %543 = vmatpush.xpose.msra.mxu0 0.0
  %544 = vmatpush.xpose.msra.mxu0 0.0
  %545 = vmatpush.xpose.msra.mxu0 0.0
  %546 = vmatpush.xpose.msra.mxu0 0.0
  %547 = vmatpush.xpose.msra.mxu0 0.0
  %548 = vmatpush.xpose.msra.mxu0 0.0
  %549 = vmatpush.xpose.msra.mxu0 0.0
  %550 = vmatpush.xpose.msra.mxu0 0.0
  %551 = vmatpush.xpose.msra.mxu0 0.0
  %552 = vmatpush.xpose.msra.mxu0 0.0
  %553 = vmatpush.xpose.msra.mxu0 0.0
  %554 = vmatpush.xpose.msra.mxu0 0.0
  %555 = vmatpush.xpose.msra.mxu0 0.0
  %556 = vmatpush.xpose.msra.mxu0 0.0
  %557 = vmatpush.xpose.msra.mxu0 %v540
  %558 = vmatmul.f32.gmra.mxu0 %v538
  %v559 = vpop.f32.mrf.mxu0
  %v560 = vadd.f32 %v503, %v559
  %561 = vdwg.mxu0
  %562 = vrot.lane.b32.xlu0 %v157, 120
  %v563 = vpop.permute.xlu0 %562
  %564 = vrot.lane.b32.xlu0 %v190, 120
  %v565 = vpop.permute.xlu0 %564
  %v566 = vsel %vm244, %v563, 0
  %v568 = vsel %vm244, %v565, 0
  %570 = vmatpush.xpose.msra.mxu0 0.0
  %571 = vmatpush.xpose.msra.mxu0 0.0
  %572 = vmatpush.xpose.msra.mxu0 0.0
  %573 = vmatpush.xpose.msra.mxu0 0.0
  %574 = vmatpush.xpose.msra.mxu0 0.0
  %575 = vmatpush.xpose.msra.mxu0 0.0
  %576 = vmatpush.xpose.msra.mxu0 0.0
  %577 = vmatpush.xpose.msra.mxu0 0.0
  %578 = vmatpush.xpose.msra.mxu0 0.0
  %579 = vmatpush.xpose.msra.mxu0 0.0
  %580 = vmatpush.xpose.msra.mxu0 0.0
  %581 = vmatpush.xpose.msra.mxu0 0.0
  %582 = vmatpush.xpose.msra.mxu0 0.0
  %583 = vmatpush.xpose.msra.mxu0 0.0
  %584 = vmatpush.xpose.msra.mxu0 0.0
  %585 = vmatpush.xpose.msra.mxu0 %v568
  %586 = vmatmul.f32.gmra.mxu0 %v566
  %v587 = vpop.f32.mrf.mxu0
  %v588 = vadd.f32 %v504, %v587
  %589 = vdwg.mxu0
  %590 = vrot.lane.b32.xlu0 %v160, 120
  %v591 = vpop.permute.xlu0 %590
  %592 = vrot.lane.b32.xlu0 %v193, 120
  %v593 = vpop.permute.xlu0 %592
  %v594 = vsel %vm244, %v591, 0
  %v596 = vsel %vm244, %v593, 0
  %598 = vmatpush.xpose.msra.mxu0 0.0
  %599 = vmatpush.xpose.msra.mxu0 0.0
  %600 = vmatpush.xpose.msra.mxu0 0.0
  %601 = vmatpush.xpose.msra.mxu0 0.0
  %602 = vmatpush.xpose.msra.mxu0 0.0
  %603 = vmatpush.xpose.msra.mxu0 0.0
  %604 = vmatpush.xpose.msra.mxu0 0.0
  %605 = vmatpush.xpose.msra.mxu0 0.0
  %606 = vmatpush.xpose.msra.mxu0 0.0
  %607 = vmatpush.xpose.msra.mxu0 0.0
  %608 = vmatpush.xpose.msra.mxu0 0.0
  %609 = vmatpush.xpose.msra.mxu0 0.0
  %610 = vmatpush.xpose.msra.mxu0 0.0
  %611 = vmatpush.xpose.msra.mxu0 0.0
  %612 = vmatpush.xpose.msra.mxu0 0.0
  %613 = vmatpush.xpose.msra.mxu0 %v596
  %614 = vmatmul.f32.gmra.mxu0 %v594
  %v615 = vpop.f32.mrf.mxu0
  %v616 = vadd.f32 %v505, %v615
  %617 = vdwg.mxu0
  %v618 = vadd.f32 %v532, %v353
  %v619 = vadd.f32 %v560, %v354
  %v620 = vadd.f32 %v588, %v355
  %v621 = vadd.f32 %v616, %v356
  %v622 = vsel %vm244, %v618, -inf
  %623 = vmax.xlane.f32.xlu0 %v622
  %v624 = vpop.xlane.xlu0 %623
  %v625 = vsel %vm244, %v619, -inf
  %626 = vmax.xlane.f32.xlu0 %v625
  %v627 = vpop.xlane.xlu0 %626
  %v628 = vsel %vm244, %v620, -inf
  %629 = vmax.xlane.f32.xlu0 %v628
  %v630 = vpop.xlane.xlu0 %629
  %v631 = vsel %vm244, %v621, -inf
  %632 = vmax.xlane.f32.xlu0 %v631
  %v633 = vpop.xlane.xlu0 %632
  %v634 = vsub.f32 %v618, %v624
  %v635 = vsub.f32 %v619, %v627
  %v636 = vsub.f32 %v620, %v630
  %v637 = vsub.f32 %v621, %v633
  %v638 = vmul.f32 %v634, 1.442695
  %v639 = vpow.pop %v638
  %v640 = vmul.f32 %v635, 1.442695
  %v641 = vpow.pop %v640
  %v642 = vmul.f32 %v636, 1.442695
  %v643 = vpow.pop %v642
  %v644 = vmul.f32 %v637, 1.442695
  %v645 = vpow.pop %v644
  %v646 = vsel %vm244, %v639, 0.0
  %647 = vadd.xlane.f32.xlu0 %v646
  %v648 = vpop.xlane.xlu0 %647
  %v649 = vsel %vm244, %v641, 0.0
  %650 = vadd.xlane.f32.xlu0 %v649
  %v651 = vpop.xlane.xlu0 %650
  %v652 = vsel %vm244, %v643, 0.0
  %653 = vadd.xlane.f32.xlu0 %v652
  %v654 = vpop.xlane.xlu0 %653
  %v655 = vsel %vm244, %v645, 0.0
  %656 = vadd.xlane.f32.xlu0 %v655
  %v657 = vpop.xlane.xlu0 %656
  %v658 = vrcp.pop %v648
  %v659 = vrcp.pop %v651
  %v660 = vrcp.pop %v654
  %v661 = vrcp.pop %v657
  %v662 = vmul.f32 %v639, %v658
  %v663 = vmul.f32 %v641, %v659
  %v664 = vmul.f32 %v643, %v660
  %v665 = vmul.f32 %v645, %v661
  %667 = vrot.lane.b32.xlu0 %v217, 120
  %v668 = vpop.permute.xlu0 %667
  %v671 = vsel %vm244, %v662, 0
  %673 = vmatpush.msra.mxu0 0.0
  %674 = vmatpush.msra.mxu0 0.0
  %675 = vmatpush.msra.mxu0 0.0
  %676 = vmatpush.msra.mxu0 0.0
  %677 = vmatpush.msra.mxu0 0.0
  %678 = vmatpush.msra.mxu0 0.0
  %679 = vmatpush.msra.mxu0 0.0
  %680 = vmatpush.msra.mxu0 0.0
  %681 = vmatpush.msra.mxu0 0.0
  %682 = vmatpush.msra.mxu0 0.0
  %683 = vmatpush.msra.mxu0 0.0
  %684 = vmatpush.msra.mxu0 0.0
  %685 = vmatpush.msra.mxu0 0.0
  %686 = vmatpush.msra.mxu0 0.0
  %687 = vmatpush.msra.mxu0 0.0
  %688 = vmatpush.msra.mxu0 %v668
  %689 = vmatmul.f32.gmra.mxu0 %v671
  %v690 = vpop.f32.mrf.mxu0
  %v691 = vadd.f32 0.0, %v690
  %692 = vdwg.mxu0
  %694 = vrot.lane.b32.xlu0 %v220, 120
  %v695 = vpop.permute.xlu0 %694
  %v698 = vsel %vm244, %v663, 0
  %700 = vmatpush.msra.mxu0 0.0
  %701 = vmatpush.msra.mxu0 0.0
  %702 = vmatpush.msra.mxu0 0.0
  %703 = vmatpush.msra.mxu0 0.0
  %704 = vmatpush.msra.mxu0 0.0
  %705 = vmatpush.msra.mxu0 0.0
  %706 = vmatpush.msra.mxu0 0.0
  %707 = vmatpush.msra.mxu0 0.0
  %708 = vmatpush.msra.mxu0 0.0
  %709 = vmatpush.msra.mxu0 0.0
  %710 = vmatpush.msra.mxu0 0.0
  %711 = vmatpush.msra.mxu0 0.0
  %712 = vmatpush.msra.mxu0 0.0
  %713 = vmatpush.msra.mxu0 0.0
  %714 = vmatpush.msra.mxu0 0.0
  %715 = vmatpush.msra.mxu0 %v695
  %716 = vmatmul.f32.gmra.mxu0 %v698
  %v717 = vpop.f32.mrf.mxu0
  %v718 = vadd.f32 0.0, %v717
  %719 = vdwg.mxu0
  %721 = vrot.lane.b32.xlu0 %v223, 120
  %v722 = vpop.permute.xlu0 %721
  %v725 = vsel %vm244, %v664, 0
  %727 = vmatpush.msra.mxu0 0.0
  %728 = vmatpush.msra.mxu0 0.0
  %729 = vmatpush.msra.mxu0 0.0
  %730 = vmatpush.msra.mxu0 0.0
  %731 = vmatpush.msra.mxu0 0.0
  %732 = vmatpush.msra.mxu0 0.0
  %733 = vmatpush.msra.mxu0 0.0
  %734 = vmatpush.msra.mxu0 0.0
  %735 = vmatpush.msra.mxu0 0.0
  %736 = vmatpush.msra.mxu0 0.0
  %737 = vmatpush.msra.mxu0 0.0
  %738 = vmatpush.msra.mxu0 0.0
  %739 = vmatpush.msra.mxu0 0.0
  %740 = vmatpush.msra.mxu0 0.0
  %741 = vmatpush.msra.mxu0 0.0
  %742 = vmatpush.msra.mxu0 %v722
  %743 = vmatmul.f32.gmra.mxu0 %v725
  %v744 = vpop.f32.mrf.mxu0
  %v745 = vadd.f32 0.0, %v744
  %746 = vdwg.mxu0
  %748 = vrot.lane.b32.xlu0 %v226, 120
  %v749 = vpop.permute.xlu0 %748
  %v752 = vsel %vm244, %v665, 0
  %754 = vmatpush.msra.mxu0 0.0
  %755 = vmatpush.msra.mxu0 0.0
  %756 = vmatpush.msra.mxu0 0.0
  %757 = vmatpush.msra.mxu0 0.0
  %758 = vmatpush.msra.mxu0 0.0
  %759 = vmatpush.msra.mxu0 0.0
  %760 = vmatpush.msra.mxu0 0.0
  %761 = vmatpush.msra.mxu0 0.0
  %762 = vmatpush.msra.mxu0 0.0
  %763 = vmatpush.msra.mxu0 0.0
  %764 = vmatpush.msra.mxu0 0.0
  %765 = vmatpush.msra.mxu0 0.0
  %766 = vmatpush.msra.mxu0 0.0
  %767 = vmatpush.msra.mxu0 0.0
  %768 = vmatpush.msra.mxu0 0.0
  %769 = vmatpush.msra.mxu0 %v749
  %770 = vmatmul.f32.gmra.mxu0 %v752
  %v771 = vpop.f32.mrf.mxu0
  %v772 = vadd.f32 0.0, %v771
  %773 = vdwg.mxu0
  %s774 = scalar_lea.vmem %s1, 16
  %v775 = vld [vmem:[%s774] sm:$0xff]
  %v776 = vld [vmem:[%s774 + $0x20] sm:$0xff]
  %v777 = vld [vmem:[%s774 + $0x40] sm:$0xff]
  %v778 = vld [vmem:[%s774 + $0x60] sm:$0xff]
  %779 = vrot.lane.b32.xlu0 %v151, 112
  %v780 = vpop.permute.xlu0 %779
  %781 = vrot.lane.b32.xlu0 %v184, 112
  %v782 = vpop.permute.xlu0 %781
  %v783 = vsel %vm244, %v780, 0
  %v785 = vsel %vm244, %v782, 0
  %787 = vmatpush.xpose.msra.mxu0 0.0
  %788 = vmatpush.xpose.msra.mxu0 0.0
  %789 = vmatpush.xpose.msra.mxu0 0.0
  %790 = vmatpush.xpose.msra.mxu0 0.0
  %791 = vmatpush.xpose.msra.mxu0 0.0
  %792 = vmatpush.xpose.msra.mxu0 0.0
  %793 = vmatpush.xpose.msra.mxu0 0.0
  %794 = vmatpush.xpose.msra.mxu0 0.0
  %795 = vmatpush.xpose.msra.mxu0 0.0
  %796 = vmatpush.xpose.msra.mxu0 0.0
  %797 = vmatpush.xpose.msra.mxu0 0.0
  %798 = vmatpush.xpose.msra.mxu0 0.0
  %799 = vmatpush.xpose.msra.mxu0 0.0
  %800 = vmatpush.xpose.msra.mxu0 0.0
  %801 = vmatpush.xpose.msra.mxu0 0.0
  %802 = vmatpush.xpose.msra.mxu0 %v785
  %803 = vmatmul.f32.gmra.mxu0 %v783
  %v804 = vpop.f32.mrf.mxu0
  %v805 = vadd.f32 %v775, %v804
  %806 = vdwg.mxu0
  %807 = vrot.lane.b32.xlu0 %v154, 112
  %v808 = vpop.permute.xlu0 %807
  %809 = vrot.lane.b32.xlu0 %v187, 112
  %v810 = vpop.permute.xlu0 %809
  %v811 = vsel %vm244, %v808, 0
  %v813 = vsel %vm244, %v810, 0
  %815 = vmatpush.xpose.msra.mxu0 0.0
  %816 = vmatpush.xpose.msra.mxu0 0.0
  %817 = vmatpush.xpose.msra.mxu0 0.0
  %818 = vmatpush.xpose.msra.mxu0 0.0
  %819 = vmatpush.xpose.msra.mxu0 0.0
  %820 = vmatpush.xpose.msra.mxu0 0.0
  %821 = vmatpush.xpose.msra.mxu0 0.0
  %822 = vmatpush.xpose.msra.mxu0 0.0
  %823 = vmatpush.xpose.msra.mxu0 0.0
  %824 = vmatpush.xpose.msra.mxu0 0.0
  %825 = vmatpush.xpose.msra.mxu0 0.0
  %826 = vmatpush.xpose.msra.mxu0 0.0
  %827 = vmatpush.xpose.msra.mxu0 0.0
  %828 = vmatpush.xpose.msra.mxu0 0.0
  %829 = vmatpush.xpose.msra.mxu0 0.0
  %830 = vmatpush.xpose.msra.mxu0 %v813
  %831 = vmatmul.f32.gmra.mxu0 %v811
  %v832 = vpop.f32.mrf.mxu0
  %v833 = vadd.f32 %v776, %v832
  %834 = vdwg.mxu0
  %835 = vrot.lane.b32.xlu0 %v157, 112
  %v836 = vpop.permute.xlu0 %835
  %837 = vrot.lane.b32.xlu0 %v190, 112
  %v838 = vpop.permute.xlu0 %837
  %v839 = vsel %vm244, %v836, 0
  %v841 = vsel %vm244, %v838, 0
  %843 = vmatpush.xpose.msra.mxu0 0.0
  %844 = vmatpush.xpose.msra.mxu0 0.0
  %845 = vmatpush.xpose.msra.mxu0 0.0
  %846 = vmatpush.xpose.msra.mxu0 0.0
  %847 = vmatpush.xpose.msra.mxu0 0.0
  %848 = vmatpush.xpose.msra.mxu0 0.0
  %849 = vmatpush.xpose.msra.mxu0 0.0
  %850 = vmatpush.xpose.msra.mxu0 0.0
  %851 = vmatpush.xpose.msra.mxu0 0.0
  %852 = vmatpush.xpose.msra.mxu0 0.0
  %853 = vmatpush.xpose.msra.mxu0 0.0
  %854 = vmatpush.xpose.msra.mxu0 0.0
  %855 = vmatpush.xpose.msra.mxu0 0.0
  %856 = vmatpush.xpose.msra.mxu0 0.0
  %857 = vmatpush.xpose.msra.mxu0 0.0
  %858 = vmatpush.xpose.msra.mxu0 %v841
  %859 = vmatmul.f32.gmra.mxu0 %v839
  %v860 = vpop.f32.mrf.mxu0
  %v861 = vadd.f32 %v777, %v860
  %862 = vdwg.mxu0
  %863 = vrot.lane.b32.xlu0 %v160, 112
  %v864 = vpop.permute.xlu0 %863
  %865 = vrot.lane.b32.xlu0 %v193, 112
  %v866 = vpop.permute.xlu0 %865
  %v867 = vsel %vm244, %v864, 0
  %v869 = vsel %vm244, %v866, 0
  %871 = vmatpush.xpose.msra.mxu0 0.0
  %872 = vmatpush.xpose.msra.mxu0 0.0
  %873 = vmatpush.xpose.msra.mxu0 0.0
  %874 = vmatpush.xpose.msra.mxu0 0.0
  %875 = vmatpush.xpose.msra.mxu0 0.0
  %876 = vmatpush.xpose.msra.mxu0 0.0
  %877 = vmatpush.xpose.msra.mxu0 0.0
  %878 = vmatpush.xpose.msra.mxu0 0.0
  %879 = vmatpush.xpose.msra.mxu0 0.0
  %880 = vmatpush.xpose.msra.mxu0 0.0
  %881 = vmatpush.xpose.msra.mxu0 0.0
  %882 = vmatpush.xpose.msra.mxu0 0.0
  %883 = vmatpush.xpose.msra.mxu0 0.0
  %884 = vmatpush.xpose.msra.mxu0 0.0
  %885 = vmatpush.xpose.msra.mxu0 0.0
  %886 = vmatpush.xpose.msra.mxu0 %v869
  %887 = vmatmul.f32.gmra.mxu0 %v867
  %v888 = vpop.f32.mrf.mxu0
  %v889 = vadd.f32 %v778, %v888
  %890 = vdwg.mxu0
  %v891 = vadd.f32 %v805, %v353
  %v892 = vadd.f32 %v833, %v354
  %v893 = vadd.f32 %v861, %v355
  %v894 = vadd.f32 %v889, %v356
  %v895 = vsel %vm244, %v891, -inf
  %896 = vmax.xlane.f32.xlu0 %v895
  %v897 = vpop.xlane.xlu0 %896
  %v898 = vsel %vm244, %v892, -inf
  %899 = vmax.xlane.f32.xlu0 %v898
  %v900 = vpop.xlane.xlu0 %899
  %v901 = vsel %vm244, %v893, -inf
  %902 = vmax.xlane.f32.xlu0 %v901
  %v903 = vpop.xlane.xlu0 %902
  %v904 = vsel %vm244, %v894, -inf
  %905 = vmax.xlane.f32.xlu0 %v904
  %v906 = vpop.xlane.xlu0 %905
  %v907 = vsub.f32 %v891, %v897
  %v908 = vsub.f32 %v892, %v900
  %v909 = vsub.f32 %v893, %v903
  %v910 = vsub.f32 %v894, %v906
  %v911 = vmul.f32 %v907, 1.442695
  %v912 = vpow.pop %v911
  %v913 = vmul.f32 %v908, 1.442695
  %v914 = vpow.pop %v913
  %v915 = vmul.f32 %v909, 1.442695
  %v916 = vpow.pop %v915
  %v917 = vmul.f32 %v910, 1.442695
  %v918 = vpow.pop %v917
  %v919 = vsel %vm244, %v912, 0.0
  %920 = vadd.xlane.f32.xlu0 %v919
  %v921 = vpop.xlane.xlu0 %920
  %v922 = vsel %vm244, %v914, 0.0
  %923 = vadd.xlane.f32.xlu0 %v922
  %v924 = vpop.xlane.xlu0 %923
  %v925 = vsel %vm244, %v916, 0.0
  %926 = vadd.xlane.f32.xlu0 %v925
  %v927 = vpop.xlane.xlu0 %926
  %v928 = vsel %vm244, %v918, 0.0
  %929 = vadd.xlane.f32.xlu0 %v928
  %v930 = vpop.xlane.xlu0 %929
  %v931 = vrcp.pop %v921
  %v932 = vrcp.pop %v924
  %v933 = vrcp.pop %v927
  %v934 = vrcp.pop %v930
  %v935 = vmul.f32 %v912, %v931
  %v936 = vmul.f32 %v914, %v932
  %v937 = vmul.f32 %v916, %v933
  %v938 = vmul.f32 %v918, %v934
  %939 = vrot.lane.b32.xlu0 %v217, 112
  %v940 = vpop.permute.xlu0 %939
  %v943 = vsel %vm244, %v935, 0
  %945 = vmatpush.msra.mxu0 0.0
  %946 = vmatpush.msra.mxu0 0.0
  %947 = vmatpush.msra.mxu0 0.0
  %948 = vmatpush.msra.mxu0 0.0
  %949 = vmatpush.msra.mxu0 0.0
  %950 = vmatpush.msra.mxu0 0.0
  %951 = vmatpush.msra.mxu0 0.0
  %952 = vmatpush.msra.mxu0 0.0
  %953 = vmatpush.msra.mxu0 0.0
  %954 = vmatpush.msra.mxu0 0.0
  %955 = vmatpush.msra.mxu0 0.0
  %956 = vmatpush.msra.mxu0 0.0
  %957 = vmatpush.msra.mxu0 0.0
  %958 = vmatpush.msra.mxu0 0.0
  %959 = vmatpush.msra.mxu0 0.0
  %960 = vmatpush.msra.mxu0 %v940
  %961 = vmatmul.f32.gmra.mxu0 %v943
  %v962 = vpop.f32.mrf.mxu0
  %v963 = vadd.f32 0.0, %v962
  %964 = vdwg.mxu0
  %965 = vrot.lane.b32.xlu0 %v220, 112
  %v966 = vpop.permute.xlu0 %965
  %v969 = vsel %vm244, %v936, 0
  %971 = vmatpush.msra.mxu0 0.0
  %972 = vmatpush.msra.mxu0 0.0
  %973 = vmatpush.msra.mxu0 0.0
  %974 = vmatpush.msra.mxu0 0.0
  %975 = vmatpush.msra.mxu0 0.0
  %976 = vmatpush.msra.mxu0 0.0
  %977 = vmatpush.msra.mxu0 0.0
  %978 = vmatpush.msra.mxu0 0.0
  %979 = vmatpush.msra.mxu0 0.0
  %980 = vmatpush.msra.mxu0 0.0
  %981 = vmatpush.msra.mxu0 0.0
  %982 = vmatpush.msra.mxu0 0.0
  %983 = vmatpush.msra.mxu0 0.0
  %984 = vmatpush.msra.mxu0 0.0
  %985 = vmatpush.msra.mxu0 0.0
  %986 = vmatpush.msra.mxu0 %v966
  %987 = vmatmul.f32.gmra.mxu0 %v969
  %v988 = vpop.f32.mrf.mxu0
  %v989 = vadd.f32 0.0, %v988
  %990 = vdwg.mxu0
  %991 = vrot.lane.b32.xlu0 %v223, 112
  %v992 = vpop.permute.xlu0 %991
  %v995 = vsel %vm244, %v937, 0
  %997 = vmatpush.msra.mxu0 0.0
  %998 = vmatpush.msra.mxu0 0.0
  %999 = vmatpush.msra.mxu0 0.0
  %1000 = vmatpush.msra.mxu0 0.0
  %1001 = vmatpush.msra.mxu0 0.0
  %1002 = vmatpush.msra.mxu0 0.0
  %1003 = vmatpush.msra.mxu0 0.0
  %1004 = vmatpush.msra.mxu0 0.0
  %1005 = vmatpush.msra.mxu0 0.0
  %1006 = vmatpush.msra.mxu0 0.0
  %1007 = vmatpush.msra.mxu0 0.0
  %1008 = vmatpush.msra.mxu0 0.0
  %1009 = vmatpush.msra.mxu0 0.0
  %1010 = vmatpush.msra.mxu0 0.0
  %1011 = vmatpush.msra.mxu0 0.0
  %1012 = vmatpush.msra.mxu0 %v992
  %1013 = vmatmul.f32.gmra.mxu0 %v995
  %v1014 = vpop.f32.mrf.mxu0
  %v1015 = vadd.f32 0.0, %v1014
  %1016 = vdwg.mxu0
  %1017 = vrot.lane.b32.xlu0 %v226, 112
  %v1018 = vpop.permute.xlu0 %1017
  %v1021 = vsel %vm244, %v938, 0
  %1023 = vmatpush.msra.mxu0 0.0
  %1024 = vmatpush.msra.mxu0 0.0
  %1025 = vmatpush.msra.mxu0 0.0
  %1026 = vmatpush.msra.mxu0 0.0
  %1027 = vmatpush.msra.mxu0 0.0
  %1028 = vmatpush.msra.mxu0 0.0
  %1029 = vmatpush.msra.mxu0 0.0
  %1030 = vmatpush.msra.mxu0 0.0
  %1031 = vmatpush.msra.mxu0 0.0
  %1032 = vmatpush.msra.mxu0 0.0
  %1033 = vmatpush.msra.mxu0 0.0
  %1034 = vmatpush.msra.mxu0 0.0
  %1035 = vmatpush.msra.mxu0 0.0
  %1036 = vmatpush.msra.mxu0 0.0
  %1037 = vmatpush.msra.mxu0 0.0
  %1038 = vmatpush.msra.mxu0 %v1018
  %1039 = vmatmul.f32.gmra.mxu0 %v1021
  %v1040 = vpop.f32.mrf.mxu0
  %v1041 = vadd.f32 0.0, %v1040
  %1042 = vdwg.mxu0
  %s1043 = scalar_lea.vmem %s1, 24
  %v1044 = vld [vmem:[%s1043] sm:$0xff]
  %v1045 = vld [vmem:[%s1043 + $0x20] sm:$0xff]
  %v1046 = vld [vmem:[%s1043 + $0x40] sm:$0xff]
  %v1047 = vld [vmem:[%s1043 + $0x60] sm:$0xff]
  %1048 = vrot.lane.b32.xlu0 %v151, 104
  %v1049 = vpop.permute.xlu0 %1048
  %1050 = vrot.lane.b32.xlu0 %v184, 104
  %v1051 = vpop.permute.xlu0 %1050
  %v1052 = vsel %vm244, %v1049, 0
  %v1054 = vsel %vm244, %v1051, 0
  %1056 = vmatpush.xpose.msra.mxu0 0.0
  %1057 = vmatpush.xpose.msra.mxu0 0.0
  %1058 = vmatpush.xpose.msra.mxu0 0.0
  %1059 = vmatpush.xpose.msra.mxu0 0.0
  %1060 = vmatpush.xpose.msra.mxu0 0.0
  %1061 = vmatpush.xpose.msra.mxu0 0.0
  %1062 = vmatpush.xpose.msra.mxu0 0.0
  %1063 = vmatpush.xpose.msra.mxu0 0.0
  %1064 = vmatpush.xpose.msra.mxu0 0.0
  %1065 = vmatpush.xpose.msra.mxu0 0.0
  %1066 = vmatpush.xpose.msra.mxu0 0.0
  %1067 = vmatpush.xpose.msra.mxu0 0.0
  %1068 = vmatpush.xpose.msra.mxu0 0.0
  %1069 = vmatpush.xpose.msra.mxu0 0.0
  %1070 = vmatpush.xpose.msra.mxu0 0.0
  %1071 = vmatpush.xpose.msra.mxu0 %v1054
  %1072 = vmatmul.f32.gmra.mxu0 %v1052
  %v1073 = vpop.f32.mrf.mxu0
  %v1074 = vadd.f32 %v1044, %v1073
  %1075 = vdwg.mxu0
  %1076 = vrot.lane.b32.xlu0 %v154, 104
  %v1077 = vpop.permute.xlu0 %1076
  %1078 = vrot.lane.b32.xlu0 %v187, 104
  %v1079 = vpop.permute.xlu0 %1078
  %v1080 = vsel %vm244, %v1077, 0
  %v1082 = vsel %vm244, %v1079, 0
  %1084 = vmatpush.xpose.msra.mxu0 0.0
  %1085 = vmatpush.xpose.msra.mxu0 0.0
  %1086 = vmatpush.xpose.msra.mxu0 0.0
  %1087 = vmatpush.xpose.msra.mxu0 0.0
  %1088 = vmatpush.xpose.msra.mxu0 0.0
  %1089 = vmatpush.xpose.msra.mxu0 0.0
  %1090 = vmatpush.xpose.msra.mxu0 0.0
  %1091 = vmatpush.xpose.msra.mxu0 0.0
  %1092 = vmatpush.xpose.msra.mxu0 0.0
  %1093 = vmatpush.xpose.msra.mxu0 0.0
  %1094 = vmatpush.xpose.msra.mxu0 0.0
  %1095 = vmatpush.xpose.msra.mxu0 0.0
  %1096 = vmatpush.xpose.msra.mxu0 0.0
  %1097 = vmatpush.xpose.msra.mxu0 0.0
  %1098 = vmatpush.xpose.msra.mxu0 0.0
  %1099 = vmatpush.xpose.msra.mxu0 %v1082
  %1100 = vmatmul.f32.gmra.mxu0 %v1080
  %v1101 = vpop.f32.mrf.mxu0
  %v1102 = vadd.f32 %v1045, %v1101
  %1103 = vdwg.mxu0
  %1104 = vrot.lane.b32.xlu0 %v157, 104
  %v1105 = vpop.permute.xlu0 %1104
  %1106 = vrot.lane.b32.xlu0 %v190, 104
  %v1107 = vpop.permute.xlu0 %1106
  %v1108 = vsel %vm244, %v1105, 0
  %v1110 = vsel %vm244, %v1107, 0
  %1112 = vmatpush.xpose.msra.mxu0 0.0
  %1113 = vmatpush.xpose.msra.mxu0 0.0
  %1114 = vmatpush.xpose.msra.mxu0 0.0
  %1115 = vmatpush.xpose.msra.mxu0 0.0
  %1116 = vmatpush.xpose.msra.mxu0 0.0
  %1117 = vmatpush.xpose.msra.mxu0 0.0
  %1118 = vmatpush.xpose.msra.mxu0 0.0
  %1119 = vmatpush.xpose.msra.mxu0 0.0
  %1120 = vmatpush.xpose.msra.mxu0 0.0
  %1121 = vmatpush.xpose.msra.mxu0 0.0
  %1122 = vmatpush.xpose.msra.mxu0 0.0
  %1123 = vmatpush.xpose.msra.mxu0 0.0
  %1124 = vmatpush.xpose.msra.mxu0 0.0
  %1125 = vmatpush.xpose.msra.mxu0 0.0
  %1126 = vmatpush.xpose.msra.mxu0 0.0
  %1127 = vmatpush.xpose.msra.mxu0 %v1110
  %1128 = vmatmul.f32.gmra.mxu0 %v1108
  %v1129 = vpop.f32.mrf.mxu0
  %v1130 = vadd.f32 %v1046, %v1129
  %1131 = vdwg.mxu0
  %1132 = vrot.lane.b32.xlu0 %v160, 104
  %v1133 = vpop.permute.xlu0 %1132
  %1134 = vrot.lane.b32.xlu0 %v193, 104
  %v1135 = vpop.permute.xlu0 %1134
  %v1136 = vsel %vm244, %v1133, 0
  %v1138 = vsel %vm244, %v1135, 0
  %1140 = vmatpush.xpose.msra.mxu0 0.0
  %1141 = vmatpush.xpose.msra.mxu0 0.0
  %1142 = vmatpush.xpose.msra.mxu0 0.0
  %1143 = vmatpush.xpose.msra.mxu0 0.0
  %1144 = vmatpush.xpose.msra.mxu0 0.0
  %1145 = vmatpush.xpose.msra.mxu0 0.0
  %1146 = vmatpush.xpose.msra.mxu0 0.0
  %1147 = vmatpush.xpose.msra.mxu0 0.0
  %1148 = vmatpush.xpose.msra.mxu0 0.0
  %1149 = vmatpush.xpose.msra.mxu0 0.0
  %1150 = vmatpush.xpose.msra.mxu0 0.0
  %1151 = vmatpush.xpose.msra.mxu0 0.0
  %1152 = vmatpush.xpose.msra.mxu0 0.0
  %1153 = vmatpush.xpose.msra.mxu0 0.0
  %1154 = vmatpush.xpose.msra.mxu0 0.0
  %1155 = vmatpush.xpose.msra.mxu0 %v1138
  %1156 = vmatmul.f32.gmra.mxu0 %v1136
  %v1157 = vpop.f32.mrf.mxu0
  %v1158 = vadd.f32 %v1047, %v1157
  %1159 = vdwg.mxu0
  %v1160 = vadd.f32 %v1074, %v353
  %v1161 = vadd.f32 %v1102, %v354
  %v1162 = vadd.f32 %v1130, %v355
  %v1163 = vadd.f32 %v1158, %v356
  %v1164 = vsel %vm244, %v1160, -inf
  %1165 = vmax.xlane.f32.xlu0 %v1164
  %v1166 = vpop.xlane.xlu0 %1165
  %v1167 = vsel %vm244, %v1161, -inf
  %1168 = vmax.xlane.f32.xlu0 %v1167
  %v1169 = vpop.xlane.xlu0 %1168
  %v1170 = vsel %vm244, %v1162, -inf
  %1171 = vmax.xlane.f32.xlu0 %v1170
  %v1172 = vpop.xlane.xlu0 %1171
  %v1173 = vsel %vm244, %v1163, -inf
  %1174 = vmax.xlane.f32.xlu0 %v1173
  %v1175 = vpop.xlane.xlu0 %1174
  %v1176 = vsub.f32 %v1160, %v1166
  %v1177 = vsub.f32 %v1161, %v1169
  %v1178 = vsub.f32 %v1162, %v1172
  %v1179 = vsub.f32 %v1163, %v1175
  %v1180 = vmul.f32 %v1176, 1.442695
  %v1181 = vpow.pop %v1180
  %v1182 = vmul.f32 %v1177, 1.442695
  %v1183 = vpow.pop %v1182
  %v1184 = vmul.f32 %v1178, 1.442695
  %v1185 = vpow.pop %v1184
  %v1186 = vmul.f32 %v1179, 1.442695
  %v1187 = vpow.pop %v1186
  %v1188 = vsel %vm244, %v1181, 0.0
  %1189 = vadd.xlane.f32.xlu0 %v1188
  %v1190 = vpop.xlane.xlu0 %1189
  %v1191 = vsel %vm244, %v1183, 0.0
  %1192 = vadd.xlane.f32.xlu0 %v1191
  %v1193 = vpop.xlane.xlu0 %1192
  %v1194 = vsel %vm244, %v1185, 0.0
  %1195 = vadd.xlane.f32.xlu0 %v1194
  %v1196 = vpop.xlane.xlu0 %1195
  %v1197 = vsel %vm244, %v1187, 0.0
  %1198 = vadd.xlane.f32.xlu0 %v1197
  %v1199 = vpop.xlane.xlu0 %1198
  %v1200 = vrcp.pop %v1190
  %v1201 = vrcp.pop %v1193
  %v1202 = vrcp.pop %v1196
  %v1203 = vrcp.pop %v1199
  %v1204 = vmul.f32 %v1181, %v1200
  %v1205 = vmul.f32 %v1183, %v1201
  %v1206 = vmul.f32 %v1185, %v1202
  %v1207 = vmul.f32 %v1187, %v1203
  %1208 = vrot.lane.b32.xlu0 %v217, 104
  %v1209 = vpop.permute.xlu0 %1208
  %v1212 = vsel %vm244, %v1204, 0
  %1214 = vmatpush.msra.mxu0 0.0
  %1215 = vmatpush.msra.mxu0 0.0
  %1216 = vmatpush.msra.mxu0 0.0
  %1217 = vmatpush.msra.mxu0 0.0
  %1218 = vmatpush.msra.mxu0 0.0
  %1219 = vmatpush.msra.mxu0 0.0
  %1220 = vmatpush.msra.mxu0 0.0
  %1221 = vmatpush.msra.mxu0 0.0
  %1222 = vmatpush.msra.mxu0 0.0
  %1223 = vmatpush.msra.mxu0 0.0
  %1224 = vmatpush.msra.mxu0 0.0
  %1225 = vmatpush.msra.mxu0 0.0
  %1226 = vmatpush.msra.mxu0 0.0
  %1227 = vmatpush.msra.mxu0 0.0
  %1228 = vmatpush.msra.mxu0 0.0
  %1229 = vmatpush.msra.mxu0 %v1209
  %1230 = vmatmul.f32.gmra.mxu0 %v1212
  %v1231 = vpop.f32.mrf.mxu0
  %v1232 = vadd.f32 0.0, %v1231
  %1233 = vdwg.mxu0
  %1234 = vrot.lane.b32.xlu0 %v220, 104
  %v1235 = vpop.permute.xlu0 %1234
  %v1238 = vsel %vm244, %v1205, 0
  %1240 = vmatpush.msra.mxu0 0.0
  %1241 = vmatpush.msra.mxu0 0.0
  %1242 = vmatpush.msra.mxu0 0.0
  %1243 = vmatpush.msra.mxu0 0.0
  %1244 = vmatpush.msra.mxu0 0.0
  %1245 = vmatpush.msra.mxu0 0.0
  %1246 = vmatpush.msra.mxu0 0.0
  %1247 = vmatpush.msra.mxu0 0.0
  %1248 = vmatpush.msra.mxu0 0.0
  %1249 = vmatpush.msra.mxu0 0.0
  %1250 = vmatpush.msra.mxu0 0.0
  %1251 = vmatpush.msra.mxu0 0.0
  %1252 = vmatpush.msra.mxu0 0.0
  %1253 = vmatpush.msra.mxu0 0.0
  %1254 = vmatpush.msra.mxu0 0.0
  %1255 = vmatpush.msra.mxu0 %v1235
  %1256 = vmatmul.f32.gmra.mxu0 %v1238
  %v1257 = vpop.f32.mrf.mxu0
  %v1258 = vadd.f32 0.0, %v1257
  %1259 = vdwg.mxu0
  %1260 = vrot.lane.b32.xlu0 %v223, 104
  %v1261 = vpop.permute.xlu0 %1260
  %v1264 = vsel %vm244, %v1206, 0
  %1266 = vmatpush.msra.mxu0 0.0
  %1267 = vmatpush.msra.mxu0 0.0
  %1268 = vmatpush.msra.mxu0 0.0
  %1269 = vmatpush.msra.mxu0 0.0
  %1270 = vmatpush.msra.mxu0 0.0
  %1271 = vmatpush.msra.mxu0 0.0
  %1272 = vmatpush.msra.mxu0 0.0
  %1273 = vmatpush.msra.mxu0 0.0
  %1274 = vmatpush.msra.mxu0 0.0
  %1275 = vmatpush.msra.mxu0 0.0
  %1276 = vmatpush.msra.mxu0 0.0
  %1277 = vmatpush.msra.mxu0 0.0
  %1278 = vmatpush.msra.mxu0 0.0
  %1279 = vmatpush.msra.mxu0 0.0
  %1280 = vmatpush.msra.mxu0 0.0
  %1281 = vmatpush.msra.mxu0 %v1261
  %1282 = vmatmul.f32.gmra.mxu0 %v1264
  %v1283 = vpop.f32.mrf.mxu0
  %v1284 = vadd.f32 0.0, %v1283
  %1285 = vdwg.mxu0
  %1286 = vrot.lane.b32.xlu0 %v226, 104
  %v1287 = vpop.permute.xlu0 %1286
  %v1290 = vsel %vm244, %v1207, 0
  %1292 = vmatpush.msra.mxu0 0.0
  %1293 = vmatpush.msra.mxu0 0.0
  %1294 = vmatpush.msra.mxu0 0.0
  %1295 = vmatpush.msra.mxu0 0.0
  %1296 = vmatpush.msra.mxu0 0.0
  %1297 = vmatpush.msra.mxu0 0.0
  %1298 = vmatpush.msra.mxu0 0.0
  %1299 = vmatpush.msra.mxu0 0.0
  %1300 = vmatpush.msra.mxu0 0.0
  %1301 = vmatpush.msra.mxu0 0.0
  %1302 = vmatpush.msra.mxu0 0.0
  %1303 = vmatpush.msra.mxu0 0.0
  %1304 = vmatpush.msra.mxu0 0.0
  %1305 = vmatpush.msra.mxu0 0.0
  %1306 = vmatpush.msra.mxu0 0.0
  %1307 = vmatpush.msra.mxu0 %v1287
  %1308 = vmatmul.f32.gmra.mxu0 %v1290
  %v1309 = vpop.f32.mrf.mxu0
  %v1310 = vadd.f32 0.0, %v1309
  %1311 = vdwg.mxu0
  %1316 = vrot.lane.b32.xlu0 %v691, 8
  %v1317 = vpop.permute.xlu0 %1316
  %1318 = vrot.lane.b32.xlu0 %v718, 8
  %v1319 = vpop.permute.xlu0 %1318
  %1320 = vrot.lane.b32.xlu0 %v745, 8
  %v1321 = vpop.permute.xlu0 %1320
  %1322 = vrot.lane.b32.xlu0 %v772, 8
  %v1323 = vpop.permute.xlu0 %1322
  %1332 = vrot.lane.b32.xlu0 %v963, 16
  %v1333 = vpop.permute.xlu0 %1332
  %1334 = vrot.lane.b32.xlu0 %v989, 16
  %v1335 = vpop.permute.xlu0 %1334
  %1336 = vrot.lane.b32.xlu0 %v1015, 16
  %v1337 = vpop.permute.xlu0 %1336
  %1338 = vrot.lane.b32.xlu0 %v1041, 16
  %v1339 = vpop.permute.xlu0 %1338
  %1348 = vrot.lane.b32.xlu0 %v1232, 24
  %v1349 = vpop.permute.xlu0 %1348
  %1350 = vrot.lane.b32.xlu0 %v1258, 24
  %v1351 = vpop.permute.xlu0 %1350
  %1352 = vrot.lane.b32.xlu0 %v1284, 24
  %v1353 = vpop.permute.xlu0 %1352
  %1354 = vrot.lane.b32.xlu0 %v1310, 24
  %v1355 = vpop.permute.xlu0 %1354
  %v1360 = vsel %vm244, %v430, %v1317
  %v1361 = vsel %vm244, %v453, %v1319
  %v1362 = vsel %vm244, %v476, %v1321
  %v1363 = vsel %vm244, %v499, %v1323
  %vm1364 = vcmask 130048
  %v1365 = vsel %vm1364, %v1360, %v1333
  %v1366 = vsel %vm1364, %v1361, %v1335
  %v1367 = vsel %vm1364, %v1362, %v1337
  %v1368 = vsel %vm1364, %v1363, %v1339
  %vm1369 = vcmask 195584
  %v1370 = vsel %vm1369, %v1365, %v1349
  %v1371 = vsel %vm1369, %v1366, %v1351
  %v1372 = vsel %vm1369, %v1367, %v1353
  %v1373 = vsel %vm1369, %v1368, %v1355
  %v1374 = vld [vmem:[%s7] sm:$0xff]
  %v1375 = vld [vmem:[%s7 + $0x8] sm:$0xff]
  %v1376 = vld [vmem:[%s7 + $0x10] sm:$0xff]
  %v1377 = vld [vmem:[%s7 + $0x18] sm:$0xff]
  %v1379 = vsel %vm37, %v1370, 0
  %v1382 = vsel %vm37, %v1371, 0
  %v1385 = vsel %vm37, %v1372, 0
  %v1388 = vsel %vm37, %v1373, 0
  %1390 = vmatpush.msra.mxu0 0.0
  %1391 = vmatpush.msra.mxu0 0.0
  %1392 = vmatpush.msra.mxu0 0.0
  %1393 = vmatpush.msra.mxu0 0.0
  %1394 = vmatpush.msra.mxu0 0.0
  %1395 = vmatpush.msra.mxu0 0.0
  %1396 = vmatpush.msra.mxu0 0.0
  %1397 = vmatpush.msra.mxu0 0.0
  %1398 = vmatpush.msra.mxu0 0.0
  %1399 = vmatpush.msra.mxu0 0.0
  %1400 = vmatpush.msra.mxu0 0.0
  %1401 = vmatpush.msra.mxu0 0.0
  %1402 = vmatpush.msra.mxu0 %v1377
  %1403 = vmatpush.msra.mxu0 %v1376
  %1404 = vmatpush.msra.mxu0 %v1375
  %1405 = vmatpush.msra.mxu0 %v1374
  %1406 = vmatmul.f32.gmra.mxu0 %v1379
  %v1407 = vpop.f32.mrf.mxu0
  %v1408 = vadd.f32 0.0, %v1407
  %1409 = vmatmul.f32.gmra.mxu0 %v1382
  %v1410 = vpop.f32.mrf.mxu0
  %v1411 = vadd.f32 0.0, %v1410
  %1412 = vmatmul.f32.gmra.mxu0 %v1385
  %v1413 = vpop.f32.mrf.mxu0
  %v1414 = vadd.f32 0.0, %v1413
  %1415 = vmatmul.f32.gmra.mxu0 %v1388
  %v1416 = vpop.f32.mrf.mxu0
  %v1417 = vadd.f32 0.0, %v1416
  %1418 = vdwg.mxu0
  %v1419 = vld [vmem:[%s0] sm:$0xff]
  %v1420 = vld [vmem:[%s0 + $0x8] sm:$0xff]
  %v1421 = vld [vmem:[%s0 + $0x10] sm:$0xff]
  %v1422 = vld [vmem:[%s0 + $0x18] sm:$0xff]
  %v1423 = vadd.f32 %v1408, %v1419
  %v1424 = vadd.f32 %v1411, %v1420
  %v1425 = vadd.f32 %v1414, %v1421
  %v1426 = vadd.f32 %v1417, %v1422
  %1427 = vst.msk [vmem:[%s8] sm:$0xff] %vm37, %v1423
  %1428 = vst.msk [vmem:[%s8 + $0x8] sm:$0xff] %vm37, %v1424
  %1429 = vst.msk [vmem:[%s8 + $0x10] sm:$0xff] %vm37, %v1425
  %1430 = vst.msk [vmem:[%s8 + $0x18] sm:$0xff] %vm37, %v1426
  // Predicated region
  $region34: #{t5_block.2} parent=0 // pred_check
    _
  $region35: #{t5_block.2} parent=0 // pred_check_branch
    %1432 = sbr.rel (0) target = $region37
  $region36: #{t5_block.2} parent=0 // pred_region
    _
  $region37: #{t5_block.2} parent=0 // pred_fallthru
    _
  // Predicated region
  $region38: #{t5_block.2} parent=0 // pred_check
    _
  $region39: #{t5_block.2} parent=0 // pred_check_branch
    %1434 = sbr.rel (0) target = $region41
  $region40: #{t5_block.2} parent=0 // pred_region
    _
  $region41: #{t5_block.2} parent=0 // pred_fallthru
    _

</llo_original>
